<compile_context>
chip_gen: v6e
topology: v6e:2x2x1
jax: 0.10.0
libtpu: 0.0.40
codegen_flags: <defaults>
</compile_context>

<pallas_src>
import functools

import jax
import jax.numpy as jnp
from jax import lax
from jax.experimental import pallas as pl
from jax.experimental.pallas import tpu as pltpu


def _sublane_granule(itemsize):
    """Packed sublane granule: 8 rows for f32, 16 for bf16, 32 for int8/fp8."""
    return max(8, 32 // itemsize)


def _tpu_budget():
    """(vmem_capacity, prefer_split_channel_blocks, max_block_bytes)."""
    vmem_cap = 128 * 2**20
    try:
        info = pltpu.get_tpu_info()
        vmem_cap = int(getattr(info, "vmem_capacity_bytes", vmem_cap))
    except Exception:
        pass
    if vmem_cap <= 64 * 2**20:
        # v7x-class: 64 MiB VMEM/TC, 2 TensorCores per chip -> smaller blocks,
        # and prefer >=2 channel blocks so both cores get work even at batch=1.
        return vmem_cap, True, int(3.5 * 2**20)
    # v5e/v6e: 128 MiB VMEM, single TensorCore -> fewest, fattest grid steps
    # (amortizes the ~0.35us per-step overhead for a mem-bound kernel).
    return vmem_cap, False, 14 * 2**20


def _pick_channels_per_block(C, group_size, hw, itemsize, *,
                             max_block_bytes, prefer_split):
    """Channel-block size: whole groups, aligned to the packed sublane granule."""
    num_groups = C // group_size
    granule = _sublane_granule(itemsize)
    candidates = []
    for gb in range(1, num_groups + 1):
        if num_groups % gb:
            continue
        cpb = gb * group_size
        if cpb % granule == 0 or cpb == C:
            candidates.append(cpb)
    if not candidates:
        return C
    hw_pad = -(-hw // 128) * 128
    fitting = [c for c in candidates
               if (-(-c // granule) * granule) * hw_pad * itemsize <= max_block_bytes]
    if not fitting:
        # TODO(synk): for very large H*W where even the smallest whole-group
        # slab exceeds the VMEM budget, add a spatially tiled two-pass variant.
        return min(candidates)
    if prefer_split:
        multi = [c for c in fitting if c < C]
        if multi:
            return max(multi)
    return max(fitting)


def _pick_lane_chunk(cpb, hw, f32_bytes_budget=1 << 20):
    """Largest lane chunk (multiple of 128, dividing HW) whose f32 slab fits."""
    if hw % 128 != 0 or cpb * hw * 4 <= f32_bytes_budget:
        # Non-128 HW: single chunk (block last dim == full HW still compiles;
        # stores become masked — acceptable, lane padding in HBM costs traffic).
        return hw
    q = hw // 128
    best = 128
    for d in range(1, q + 1):
        if q % d == 0 and cpb * (128 * d) * 4 <= f32_bytes_budget:
            best = 128 * d
    return best


def _groupnorm_kernel(x_ref, m_ref, gamma_ref, beta_ref, o_ref, *,
                      group_size, eps, cpb, lane_chunk):
    """Normalize one (channel-block, H*W) slab of one batch element.

    x_ref     : (cpb, HW)  input slab (channels on sublanes, H*W on lanes)
    m_ref     : (cpb, cpb) block-diagonal group-membership matrix (f32, resident)
    gamma_ref : (C, 1)     per-channel scale (full array, resident)
    beta_ref  : (C, 1)     per-channel shift (full array, resident)
    o_ref     : (cpb, HW)  output slab
    """
    hw = x_ref.shape[-1]
    num_chunks = hw // lane_chunk

    # ---- Pass 1: per-channel sum / sum-of-squares (f32 lane reductions),
    # chunked over lanes so live f32 temporaries stay small.
    def chunk_moments(start, size):
        xc = x_ref[:, pl.ds(start, size)].astype(jnp.float32)
        return (jnp.sum(xc, axis=-1, keepdims=True),
                jnp.sum(xc * xc, axis=-1, keepdims=True))

    if num_chunks == 1:
        s, ss = chunk_moments(0, hw)
    else:
        def moment_body(c, carry):
            s_acc, ss_acc = carry
            start = pl.multiple_of(c * lane_chunk, 128)
            ds_, dss_ = chunk_moments(start, lane_chunk)
            return s_acc + ds_, ss_acc + dss_
        init = (jnp.zeros((cpb, 1), jnp.float32),
                jnp.zeros((cpb, 1), jnp.float32))
        s, ss = lax.fori_loop(0, num_chunks, moment_body, init,
                              unroll=num_chunks <= 8)

    # ---- Group statistics: tiny block-diagonal matmul sums channels within
    # each group (~cpb^2 MACs per moment; negligible vs. HBM streaming).
    m = m_ref[...]
    g_sum = jnp.dot(m, s, preferred_element_type=jnp.float32,
                    precision=lax.Precision.HIGHEST)          # (cpb, 1)
    g_ssq = jnp.dot(m, ss, preferred_element_type=jnp.float32,
                    precision=lax.Precision.HIGHEST)          # (cpb, 1)

    inv_n = 1.0 / float(group_size * hw)
    mean = g_sum * inv_n
    var = jnp.maximum(g_ssq * inv_n - mean * mean, 0.0)       # clamp one-pass var
    inv_std = lax.rsqrt(var + eps)

    c0 = pl.multiple_of(pl.program_id(1) * cpb, 8)
    gamma = gamma_ref[pl.ds(c0, cpb), :]                      # (cpb, 1)
    beta = beta_ref[pl.ds(c0, cpb), :]                        # (cpb, 1)
    scale = gamma * inv_std
    shift = beta - mean * scale

    # ---- Pass 2: normalize + affine.  bf16 inputs do the broadcast FMA in
    # bf16 (packed lanes, ~half the VALU/vreg traffic on v6e/v7x); else f32.
    if x_ref.dtype == jnp.bfloat16 and o_ref.dtype == jnp.bfloat16:
        scale_c = scale.astype(jnp.bfloat16)
        shift_c = shift.astype(jnp.bfloat16)
        normalize = lambda xc: (xc * scale_c + shift_c).astype(o_ref.dtype)
    else:
        normalize = lambda xc: (xc.astype(jnp.float32) * scale
                                + shift).astype(o_ref.dtype)

    if num_chunks == 1:
        o_ref[...] = normalize(x_ref[...])
    else:
        def norm_body(c, carry):
            start = pl.multiple_of(c * lane_chunk, 128)
            o_ref[:, pl.ds(start, lane_chunk)] = normalize(
                x_ref[:, pl.ds(start, lane_chunk)])
            return carry
        lax.fori_loop(0, num_chunks, norm_body, 0, unroll=num_chunks <= 8)


def groupnorm_forward(x, gamma, beta, *, num_groups=32, eps=1e-6):
    """Equivalent of nn.GroupNorm(num_groups, C, eps, affine=True)(x), NCHW."""
    N, C, H, W = x.shape
    assert C % num_groups == 0, (C, num_groups)
    group_size = C // num_groups
    HW = H * W
    itemsize = jnp.dtype(x.dtype).itemsize

    vmem_cap, prefer_split, max_block_bytes = _tpu_budget()
    cpb = _pick_channels_per_block(C, group_size, HW, itemsize,
                                   max_block_bytes=max_block_bytes,
                                   prefer_split=prefer_split)
    num_cblocks = C // cpb
    lane_chunk = _pick_lane_chunk(cpb, HW)
    assert HW % lane_chunk == 0

    # Free layout changes only (trailing-dim merge); no transposes, no pads.
    x3 = x.reshape(N, C, HW)
    gamma2 = gamma.reshape(C, 1).astype(jnp.float32)
    beta2 = beta.reshape(C, 1).astype(jnp.float32)

    # Block-diagonal group membership for one channel block (identical for all
    # channel blocks since each block holds whole, contiguous groups).
    m = jnp.kron(jnp.eye(cpb // group_size, dtype=jnp.float32),
                 jnp.ones((group_size, group_size), jnp.float32))

    # VMEM budget: double-buffered in/out slabs + resident m/params + in-kernel
    # f32 temporaries (bounded by the lane chunk) + compiler slack.
    granule = _sublane_granule(itemsize)
    hw_pad = -(-HW // 128) * 128
    cpb_pad = -(-cpb // granule) * granule
    c_pad = -(-C // 8) * 8
    block_bytes = cpb_pad * hw_pad * itemsize
    need = (4 * block_bytes
            + 2 * cpb * cpb * 4
            + 4 * c_pad * 128 * 4
            + 3 * cpb_pad * max(lane_chunk, 128) * 4
            + (2 << 20))
    cap = int(vmem_cap * 0.75)
    vmem_limit = min(cap, max(32 << 20, int(1.3 * need)))

    cost = pl.CostEstimate(
        flops=int(6 * N * C * HW),
        transcendentals=int(N * C),
        bytes_accessed=int(2 * N * C * HW * itemsize + 2 * C * 4 + m.size * 4),
    )

    kernel = functools.partial(_groupnorm_kernel, group_size=group_size,
                               eps=eps, cpb=cpb, lane_chunk=lane_chunk)

    out3 = pl.pallas_call(
        kernel,
        out_shape=jax.ShapeDtypeStruct((N, C, HW), x.dtype),
        grid_spec=pltpu.PrefetchScalarGridSpec(
            num_scalar_prefetch=0,
            grid=(N, num_cblocks),
            in_specs=[
                pl.BlockSpec((None, cpb, HW), lambda n, cb: (n, cb, 0)),
                pl.BlockSpec((cpb, cpb), lambda n, cb: (0, 0)),   # resident
                pl.BlockSpec((C, 1), lambda n, cb: (0, 0)),       # resident
                pl.BlockSpec((C, 1), lambda n, cb: (0, 0)),       # resident
            ],
            out_specs=pl.BlockSpec((None, cpb, HW), lambda n, cb: (n, cb, 0)),
        ),
        compiler_params=pltpu.CompilerParams(
            dimension_semantics=("parallel", "parallel"),
            vmem_limit_bytes=int(vmem_limit),
        ),
        cost_estimate=cost,
    )(x3, m, gamma2, beta2)

    return out3.reshape(N, C, H, W)


def _groupnorm_ref(x, gamma, beta, num_groups, eps):
    """Pure-JAX reference matching torch.nn.GroupNorm semantics."""
    N, C, H, W = x.shape
    gsz = C // num_groups
    xg = x.reshape(N, num_groups, gsz * H * W).astype(jnp.float32)
    mean = xg.mean(axis=-1, keepdims=True)
    var = jnp.mean((xg - mean) ** 2, axis=-1, keepdims=True)
    xhat = ((xg - mean) / jnp.sqrt(var + eps)).reshape(N, C, H, W)
    return xhat * gamma.reshape(1, C, 1, 1) + beta.reshape(1, C, 1, 1)


if __name__ == "__main__":
    key = jax.random.PRNGKey(0)
    k_x, k_g, k_b = jax.random.split(key, 3)

    # num_groups=32 requires channels % 32 == 0; use a small valid shape.
    N, C, H, W = 2, 64, 16, 16
    G, EPS = 32, 1e-6

    x = jax.random.normal(k_x, (N, C, H, W), jnp.float32)
    # affine=True params (PyTorch default init is gamma=1, beta=0; perturb them
    # deterministically so the affine path is actually exercised).
    gamma = 1.0 + 0.1 * jax.random.normal(k_g, (C,), jnp.float32)
    beta = 0.1 * jax.random.normal(k_b, (C,), jnp.float32)

    out = jax.block_until_ready(
        groupnorm_forward(x, gamma, beta, num_groups=G, eps=EPS))
    ref = jax.block_until_ready(_groupnorm_ref(x, gamma, beta, G, EPS))

    assert out.shape == (N, C, H, W), out.shape
    max_err = float(jnp.max(jnp.abs(out - ref)))
    assert jnp.allclose(out, ref, atol=1e-4, rtol=1e-4), max_err

    print("KERNEL_OK")
</pallas_src>

<mosaic_0001>
module attributes {stable_mosaic.version = 11 : i64} {
  func.func @_groupnorm_kernel(%arg0: i32, %arg1: i32, %arg2: memref<1x64x256xf32, #tpu.memory_space<vmem>>, %arg3: memref<64x64xf32, #tpu.memory_space<vmem>>, %arg4: memref<64x1xf32, #tpu.memory_space<vmem>>, %arg5: memref<64x1xf32, #tpu.memory_space<vmem>>, %arg6: memref<1x64x256xf32, #tpu.memory_space<vmem>>) attributes {dimension_semantics = [#tpu.dimension_semantics<parallel>, #tpu.dimension_semantics<parallel>], iteration_bounds = array<i64: 2, 1>, scalar_prefetch = 0 : i64, scratch_operands = 0 : i64, tpu.core_type = #tpu.core_type<tc>, window_params = [{transform_indices = @transform_0, window_bounds = array<i64: 1, 64, 256>}, {pipeline_mode = #tpu.pipeline_mode<synchronous>, transform_indices = @transform_1, window_bounds = array<i64: 64, 64>}, {pipeline_mode = #tpu.pipeline_mode<synchronous>, transform_indices = @transform_2, window_bounds = array<i64: 64, 1>}, {pipeline_mode = #tpu.pipeline_mode<synchronous>, transform_indices = @transform_3, window_bounds = array<i64: 64, 1>}, {transform_indices = @transform_4, window_bounds = array<i64: 1, 64, 256>}]} {
    %c0 = arith.constant 0 : index
    %c0_0 = arith.constant 0 : index
    %c0_1 = arith.constant 0 : index
    %0 = vector.load %arg2[%c0, %c0_0, %c0_1] : memref<1x64x256xf32, #tpu.memory_space<vmem>>, vector<1x64x256xf32>
    %1 = vector.shape_cast %0 : vector<1x64x256xf32> to vector<64x256xf32>
    %cst = arith.constant dense<0.000000e+00> : vector<64xf32>
    %2 = vector.multi_reduction <add>, %1, %cst [1] : vector<64x256xf32> to vector<64xf32>
    %3 = vector.shape_cast %2 : vector<64xf32> to vector<64x1xf32>
    %4 = arith.mulf %1, %1 : vector<64x256xf32>
    %cst_2 = arith.constant dense<0.000000e+00> : vector<64xf32>
    %5 = vector.multi_reduction <add>, %4, %cst_2 [1] : vector<64x256xf32> to vector<64xf32>
    %6 = vector.shape_cast %5 : vector<64xf32> to vector<64x1xf32>
    %c0_3 = arith.constant 0 : index
    %c0_4 = arith.constant 0 : index
    %7 = vector.load %arg3[%c0_3, %c0_4] : memref<64x64xf32, #tpu.memory_space<vmem>>, vector<64x64xf32>
    %cst_5 = arith.constant dense<0.000000e+00> : vector<64x1xf32>
    %8 = tpu.matmul %7, %3, %cst_5 {dimension_numbers = #tpu.dot_dimension_numbers<[1], [0], [0], [1], [0, 0, 1, 1], [], []>, precision = #tpu.contract_precision<fp32>} : vector<64x64xf32>, vector<64x1xf32>, vector<64x1xf32> -> vector<64x1xf32>
    %cst_6 = arith.constant dense<0.000000e+00> : vector<64x1xf32>
    %9 = tpu.matmul %7, %6, %cst_6 {dimension_numbers = #tpu.dot_dimension_numbers<[1], [0], [0], [1], [0, 0, 1, 1], [], []>, precision = #tpu.contract_precision<fp32>} : vector<64x64xf32>, vector<64x1xf32>, vector<64x1xf32> -> vector<64x1xf32>
    %cst_7 = arith.constant 0.001953125 : f32
    %10 = vector.broadcast %cst_7 : f32 to vector<64x1xf32>
    %11 = arith.mulf %8, %10 : vector<64x1xf32>
    %cst_8 = arith.constant 0.001953125 : f32
    %12 = vector.broadcast %cst_8 : f32 to vector<64x1xf32>
    %13 = arith.mulf %9, %12 : vector<64x1xf32>
    %14 = arith.mulf %11, %11 : vector<64x1xf32>
    %15 = arith.subf %13, %14 : vector<64x1xf32>
    %cst_9 = arith.constant 0.000000e+00 : f32
    %16 = vector.broadcast %cst_9 : f32 to vector<64x1xf32>
    %17 = arith.maximumf %15, %16 : vector<64x1xf32>
    %cst_10 = arith.constant 9.99999997E-7 : f32
    %18 = vector.broadcast %cst_10 : f32 to vector<64x1xf32>
    %19 = arith.addf %17, %18 : vector<64x1xf32>
    %20 = math.rsqrt %19 : vector<64x1xf32>
    %c64_i32 = arith.constant 64 : i32
    %21 = arith.muli %arg1, %c64_i32 : i32
    %22 = tpu.assume_multiple %21, 8 : i32
    %23 = arith.index_cast %22 : i32 to index
    %c0_11 = arith.constant 0 : index
    %24 = vector.load %arg4[%23, %c0_11] : memref<64x1xf32, #tpu.memory_space<vmem>>, vector<64x1xf32>
    %25 = arith.index_cast %22 : i32 to index
    %c0_12 = arith.constant 0 : index
    %26 = vector.load %arg5[%25, %c0_12] : memref<64x1xf32, #tpu.memory_space<vmem>>, vector<64x1xf32>
    %27 = arith.mulf %24, %20 : vector<64x1xf32>
    %28 = arith.mulf %11, %27 : vector<64x1xf32>
    %29 = arith.subf %26, %28 : vector<64x1xf32>
    %c0_13 = arith.constant 0 : index
    %c0_14 = arith.constant 0 : index
    %c0_15 = arith.constant 0 : index
    %30 = vector.load %arg2[%c0_13, %c0_14, %c0_15] : memref<1x64x256xf32, #tpu.memory_space<vmem>>, vector<1x64x256xf32>
    %31 = vector.shape_cast %30 : vector<1x64x256xf32> to vector<64x256xf32>
    %32 = vector.broadcast %27 : vector<64x1xf32> to vector<64x256xf32>
    %33 = arith.mulf %31, %32 : vector<64x256xf32>
    %34 = vector.broadcast %29 : vector<64x1xf32> to vector<64x256xf32>
    %35 = arith.addf %33, %34 : vector<64x256xf32>
    %c0_16 = arith.constant 0 : index
    %c0_17 = arith.constant 0 : index
    %c0_18 = arith.constant 0 : index
    %36 = vector.load %arg6[%c0_16, %c0_17, %c0_18] : memref<1x64x256xf32, #tpu.memory_space<vmem>>, vector<1x64x256xf32>
    %37 = vector.shape_cast %36 : vector<1x64x256xf32> to vector<64x256xf32>
    %38 = vector.shape_cast %35 : vector<64x256xf32> to vector<1x64x256xf32>
    tpu.vector_store %arg6[%c0_16, %c0_17, %c0_18], %38 {strides = array<i32>} : memref<1x64x256xf32, #tpu.memory_space<vmem>>, vector<1x64x256xf32>,
    return
  }
  func.func @transform_0(%arg0: i32, %arg1: i32) -> (i32, i32, i32) {
    %c0_i32 = arith.constant 0 : i32
    %c0_i32_0 = arith.constant 0 : i32
    return %arg0, %arg1, %c0_i32 : i32, i32, i32
  }
  func.func @transform_1(%arg0: i32, %arg1: i32) -> (i32, i32) {
    %c0_i32 = arith.constant 0 : i32
    %c0_i32_0 = arith.constant 0 : i32
    %c0_i32_1 = arith.constant 0 : i32
    return %c0_i32, %c0_i32_0 : i32, i32
  }
  func.func @transform_2(%arg0: i32, %arg1: i32) -> (i32, i32) {
    %c0_i32 = arith.constant 0 : i32
    %c0_i32_0 = arith.constant 0 : i32
    %c0_i32_1 = arith.constant 0 : i32
    return %c0_i32, %c0_i32_0 : i32, i32
  }
  func.func @transform_3(%arg0: i32, %arg1: i32) -> (i32, i32) {
    %c0_i32 = arith.constant 0 : i32
    %c0_i32_0 = arith.constant 0 : i32
    %c0_i32_1 = arith.constant 0 : i32
    return %c0_i32, %c0_i32_0 : i32, i32
  }
  func.func @transform_4(%arg0: i32, %arg1: i32) -> (i32, i32, i32) {
    %c0_i32 = arith.constant 0 : i32
    %c0_i32_0 = arith.constant 0 : i32
    return %arg0, %arg1, %c0_i32 : i32, i32, i32
  }
}

</mosaic_0001>

<llo_original>
// kernel: tpu_custom_call.1
$region0: #{tpu_custom_call.1}
  #allocation0 [shape = 'u32[]', space=smem, size = 0x4, offset = 0x4, fixed_abs, tag = 'smem constant byte address 0x4 - core index']
  #allocation1 [shape = 'u32[144,128]{1,0:T(1,128)}', space=vmem, size = 0x12000, scoped, tag = 'internal scratch']
  %s0 = inlined_call_operand.hbm [shape: f32[2,64,256], index: 0, kind: input, shape index: {}]
  %s1 = inlined_call_operand.vmem [shape: f32[64,64], index: 1, kind: input, shape index: {}]
  %s2 = inlined_call_operand.vmem [shape: f32[64,1], index: 2, kind: input, shape index: {}]
  %s3 = inlined_call_operand.vmem [shape: f32[64,1], index: 3, kind: input, shape index: {}]
  %s4 = inlined_call_operand.hbm [shape: f32[2,64,256], index: 4, kind: output, shape index: {}]
  %s5 = sld [smem:[#allocation0]]
  $region53: #{tpu_custom_call.1} parent=0
    _
  %s7 = ssub.s32 1, %s5
  %s8 = scalar_select 0, %s7, %s5
  $region1: #{tpu_custom_call.1} parent=0
    #allocation2 [shape = 'u8[131072]{0}', space=vmem, size = 0x20000, scoped, tag = 'input window, operand 0']
    #allocation3 [shape = 's32[2]{0}', space=sflag, size = 0x8, scoped, tag = 'scoped memory for tpu_custom_call.1']
    #allocation4 [shape = 's32[2]{0}', space=sflag, size = 0x8, scoped, tag = 'scoped memory for tpu_custom_call.1']
    #allocation5 [shape = 'u8[131072]{0}', space=vmem, size = 0x20000, scoped, tag = 'output window, operand 0']
    %9 = vsyncpa [#allocation3], 0
    %s10 = scalar_lea.sflag [#allocation3], 1
    %11 = vsyncpa %s10, 0
    %12 = vsyncpa [#allocation4], 0
    %s13 = scalar_lea.sflag [#allocation4], 1
    %14 = vsyncpa %s13, 0
    loop: start=0, step=1, limit=4
    $region2: #{tpu_custom_call.1} parent=1 // loop_pre_header
      _
    $region3: #{tpu_custom_call.1} parent=1 // loop_header
      %s16 = sphi 0, %s20
      %p17 = scmp.ge.s32.totalorder %s16, 4
      %s23 = sphi 0, %s35
      %s24 = sphi 0, %s31
      %s25 = sphi 0, %s23
      %s26 = sphi 0, %s24
      %s27 = sphi 0, %s25
      %s28 = sphi 0, %s26
      %s40 = sphi 0, %s42
      %s43 = sphi 0, %s40
      %s44 = sphi 0, %s43
      %s60 = sphi 0, %s44
      %s64 = sphi 0, %s64
      %s66 = sphi 0, %s64
      %s67 = sphi 0, %s66
      %s81 = sphi 0, %s67
      %s85 = sphi 0, %s85
      %s87 = sphi 0, %s85
      %s88 = sphi 0, %s87
      %s102 = sphi 0, %s88
      %s106 = sphi 0, %s106
      %s108 = sphi 0, %s106
      %s109 = sphi 0, %s108
      %s123 = sphi 0, %s109
      %s131 = sphi 0, %s133
      %s134 = sphi 0, %s131
      %s135 = sphi 0, %s134
      %s151 = sphi 0, %s135
    $region4: #{tpu_custom_call.1} parent=1 // loop_header_branch
      %19 = sbr.rel (%p17) target = $region8
    $region5: #{tpu_custom_call.1} parent=1 // loop_body
      %s21 = ssub.s32 %s16, 1
      %s22 = ssub.s32 %s16, 2
      %s29 = sadd.s32 1, %s24
      %p30 = scmp.ge.s32.totalorder %s29, 1
      %s31 = scalar_select %p30, 0, %s29
      %s32 = sadd.s32 1, %s23
      %s33 = scalar_select %p30, %s32, %s23
      %p34 = scmp.ge.s32.totalorder %s33, 2
      %s35 = scalar_select %p34, 0, %s33
      %s36 = ssub.s32 %s23, %s35
      %s37 = ssub.s32 %s24, %s31
      %s38 = sor.u32 %s36, %s37
      %p39 = scmp.eq.s32.totalorder %s38, 0
      %s41 = sadd.s32 %s40, 1
      %s42 = scalar_select %p39, %s40, %s41
      %p45 = pneg %p39
      %p46 = scmp.eq.s32.totalorder %s16, 1
      %p47 = por %p45, %p46
      %p48 = scmp.ne.s32.totalorder %s40, %s43
      %p49 = scmp.eq.s32.totalorder %s16, 0
      %p50 = por %p48, %p49
      %p51 = scmp.ne.s32.totalorder %s40, %s43
      %p52 = scmp.eq.s32.totalorder %s21, 1
      %p53 = por %p51, %p52
      %p54 = scmp.ne.s32.totalorder %s43, %s44
      %p55 = scmp.eq.s32.totalorder %s21, 0
      %p56 = por %p54, %p55
      %p57 = scmp.ne.s32.totalorder %s43, %s44
      %p58 = scmp.eq.s32.totalorder %s22, 1
      %p59 = por %p57, %p58
      %p61 = scmp.ne.s32.totalorder %s44, %s60
      %p62 = scmp.eq.s32.totalorder %s22, 0
      %p63 = por %p61, %p62
      %s65 = sadd.s32 %s64, 1
      %p68 = scmp.eq.s32.totalorder %s16, 1
      %p69 = scmp.ne.s32.totalorder %s64, %s66
      %p70 = scmp.eq.s32.totalorder %s16, 0
      %p71 = por %p69, %p70
      %p72 = scmp.ne.s32.totalorder %s64, %s66
      %p73 = scmp.eq.s32.totalorder %s21, 1
      %p74 = por %p72, %p73
      %p75 = scmp.ne.s32.totalorder %s66, %s67
      %p76 = scmp.eq.s32.totalorder %s21, 0
      %p77 = por %p75, %p76
      %p78 = scmp.ne.s32.totalorder %s66, %s67
      %p79 = scmp.eq.s32.totalorder %s22, 1
      %p80 = por %p78, %p79
      %p82 = scmp.ne.s32.totalorder %s67, %s81
      %p83 = scmp.eq.s32.totalorder %s22, 0
      %p84 = por %p82, %p83
      %s86 = sadd.s32 %s85, 1
      %p89 = scmp.eq.s32.totalorder %s16, 1
      %p90 = scmp.ne.s32.totalorder %s85, %s87
      %p91 = scmp.eq.s32.totalorder %s16, 0
      %p92 = por %p90, %p91
      %p93 = scmp.ne.s32.totalorder %s85, %s87
      %p94 = scmp.eq.s32.totalorder %s21, 1
      %p95 = por %p93, %p94
      %p96 = scmp.ne.s32.totalorder %s87, %s88
      %p97 = scmp.eq.s32.totalorder %s21, 0
      %p98 = por %p96, %p97
      %p99 = scmp.ne.s32.totalorder %s87, %s88
      %p100 = scmp.eq.s32.totalorder %s22, 1
      %p101 = por %p99, %p100
      %p103 = scmp.ne.s32.totalorder %s88, %s102
      %p104 = scmp.eq.s32.totalorder %s22, 0
      %p105 = por %p103, %p104
      %s107 = sadd.s32 %s106, 1
      %p110 = scmp.eq.s32.totalorder %s16, 1
      %p111 = scmp.ne.s32.totalorder %s106, %s108
      %p112 = scmp.eq.s32.totalorder %s16, 0
      %p113 = por %p111, %p112
      %p114 = scmp.ne.s32.totalorder %s106, %s108
      %p115 = scmp.eq.s32.totalorder %s21, 1
      %p116 = por %p114, %p115
      %p117 = scmp.ne.s32.totalorder %s108, %s109
      %p118 = scmp.eq.s32.totalorder %s21, 0
      %p119 = por %p117, %p118
      %p120 = scmp.ne.s32.totalorder %s108, %s109
      %p121 = scmp.eq.s32.totalorder %s22, 1
      %p122 = por %p120, %p121
      %p124 = scmp.ne.s32.totalorder %s109, %s123
      %p125 = scmp.eq.s32.totalorder %s22, 0
      %p126 = por %p124, %p125
      %s127 = ssub.s32 %s23, %s35
      %s128 = ssub.s32 %s24, %s31
      %s129 = sor.u32 %s127, %s128
      %p130 = scmp.eq.s32.totalorder %s129, 0
      %s132 = sadd.s32 %s131, 1
      %s133 = scalar_select %p130, %s131, %s132
      %p136 = pneg %p130
      %p137 = scmp.eq.s32.totalorder %s16, 1
      %p138 = por %p136, %p137
      %p139 = scmp.ne.s32.totalorder %s131, %s134
      %p140 = scmp.eq.s32.totalorder %s16, 0
      %p141 = por %p139, %p140
      %p142 = scmp.ne.s32.totalorder %s131, %s134
      %p143 = scmp.eq.s32.totalorder %s21, 1
      %p144 = por %p142, %p143
      %p145 = scmp.ne.s32.totalorder %s134, %s135
      %p146 = scmp.eq.s32.totalorder %s21, 0
      %p147 = por %p145, %p146
      %p148 = scmp.ne.s32.totalorder %s134, %s135
      %p149 = scmp.eq.s32.totalorder %s22, 1
      %p150 = por %p148, %p149
      %p152 = scmp.ne.s32.totalorder %s135, %s151
      %p153 = scmp.eq.s32.totalorder %s22, 0
      %p154 = por %p152, %p153
      %p155 = scmp.le.s32.totalorder 1, %s16
      %p156 = scmp.lt.s32.totalorder %s16, 3
      %p157 = pnand %p155, %p156
      %p158 = pneg %p157
      // Predicated region
      $region9: #{tpu_custom_call.1} parent=5 // pred_check
        _
      $region10: #{tpu_custom_call.1} parent=5 // pred_check_branch
        %160 = sbr.rel (%p157) target = $region12
      $region11: #{tpu_custom_call.1} parent=5 // pred_region
        %s161 = ssub.s32 %s16, 1
        // Predicated region
        $region13: #{tpu_custom_call.1} parent=11 // pred_check
          %p162 = pneg %p77
        $region14: #{tpu_custom_call.1} parent=11 // pred_check_branch
          %164 = sbr.rel (%p162) target = $region16
        $region15: #{tpu_custom_call.1} parent=11 // pred_region
          _
        $region16: #{tpu_custom_call.1} parent=11 // pred_fallthru
          _
        // Predicated region
        $region17: #{tpu_custom_call.1} parent=11 // pred_check
          %p165 = pneg %p98
        $region18: #{tpu_custom_call.1} parent=11 // pred_check_branch
          %167 = sbr.rel (%p165) target = $region20
        $region19: #{tpu_custom_call.1} parent=11 // pred_region
          _
        $region20: #{tpu_custom_call.1} parent=11 // pred_fallthru
          _
        // Predicated region
        $region21: #{tpu_custom_call.1} parent=11 // pred_check
          %p168 = pneg %p119
        $region22: #{tpu_custom_call.1} parent=11 // pred_check_branch
          %170 = sbr.rel (%p168) target = $region24
        $region23: #{tpu_custom_call.1} parent=11 // pred_region
          _
        $region24: #{tpu_custom_call.1} parent=11 // pred_fallthru
          _
      $region12: #{tpu_custom_call.1} parent=5 // pred_fallthru
        _
      %p171 = scmp.lt.s32.totalorder %s16, 2
      // Predicated region
      $region25: #{tpu_custom_call.1} parent=5 // pred_check
        %p172 = pneg %p171
      $region26: #{tpu_custom_call.1} parent=5 // pred_check_branch
        %174 = sbr.rel (%p172) target = $region28
      $region27: #{tpu_custom_call.1} parent=5 // pred_region
        // Predicated region
        $region29: #{tpu_custom_call.1} parent=27 // pred_check
          %p175 = pneg %p50
        $region30: #{tpu_custom_call.1} parent=27 // pred_check_branch
          %177 = sbr.rel (%p175) target = $region32
        $region31: #{tpu_custom_call.1} parent=27 // pred_region
          %s178 = sand.u32 %s40, 1
          %s179 = scalar_lea.sflag [#allocation3], %s178
          %s180 = sand.u32 %s40, 1
          %s181 = smul.addr %s180, 128
          %s182 = scalar_lea.vmem [#allocation2], %s181
          %s183 = smul.u32 8, %s24
          %s185 = ssub.s32 2048, 2048
          %186 = vsyncadd %s179, %s185
          %s187 = smul.addr %s183, 2
          %s188 = smul.addr %s23, 16
          %s189 = sadd.s32 %s187, %s188
          %s190 = smul.addr %s189, 128
          %s191 = scalar_lea.hbm %s0, %s190
          %s192 = sshll.u32 %s182, 4
          %s193 = int_to_ptr.vmem [resolvable:$true] %s192
          %198 = dma.hbm_to_vmem [thread:$0]  %s191, 2048, %s193, %s179, 256, 256, 16
        $region32: #{tpu_custom_call.1} parent=27 // pred_fallthru
          _
      $region28: #{tpu_custom_call.1} parent=5 // pred_fallthru
        _
      %p199 = scmp.le.s32.totalorder 1, %s16
      %p200 = scmp.lt.s32.totalorder %s16, 3
      %p201 = pnand %p199, %p200
      %p202 = pneg %p201
      // Predicated region
      $region33: #{tpu_custom_call.1} parent=5 // pred_check
        _
      $region34: #{tpu_custom_call.1} parent=5 // pred_check_branch
        %204 = sbr.rel (%p201) target = $region36
      $region35: #{tpu_custom_call.1} parent=5 // pred_region
        %s205 = ssub.s32 %s16, 1
        %s206 = sand.u32 %s43, 1
        %s207 = scalar_lea.sflag [#allocation3], %s206
        %s208 = sand.u32 %s43, 1
        %s209 = smul.addr %s208, 128
        %s210 = scalar_lea.vmem [#allocation2], %s209
        // Predicated region
        $region37: #{tpu_custom_call.1} parent=35 // pred_check
          %p211 = pneg %p56
        $region38: #{tpu_custom_call.1} parent=35 // pred_check_branch
          %213 = sbr.rel (%p211) target = $region40
        $region39: #{tpu_custom_call.1} parent=35 // pred_region
          %214 = dma.done %s207, 2048
        $region40: #{tpu_custom_call.1} parent=35 // pred_fallthru
          _
        %s215 = sand.u32 %s43, 1
        %s216 = scalar_lea.sflag [#allocation3], %s215
        %s217 = sand.u32 %s43, 1
        %s218 = smul.addr %s217, 128
        %s219 = scalar_lea.vmem [#allocation2], %s218
        %p220 = pneg %p56
        %p221 = pneg %p53
        %p222 = pneg %p77
        %p223 = pneg %p74
        %p224 = pneg %p98
        %p225 = pneg %p95
        %p226 = pneg %p119
        %p227 = pneg %p116
        %p228 = pneg %p147
        %p229 = pneg %p144
        %s230 = sand.u32 %s134, 1
        %s231 = scalar_lea.sflag [#allocation4], %s230
        %s232 = sand.u32 %s134, 1
        %s233 = smul.addr %s232, 128
        %s234 = scalar_lea.vmem [#allocation5], %s233
        %s235 = smul.u32 8, %s26
        %s236 = smul.u32 8, %s26
        %v237 = vld [vmem:[%s210] sm:$0xff]
        %v238 = vld [vmem:[%s210 + $0x8] sm:$0xff]
        %v239 = vld [vmem:[%s210 + $0x10] sm:$0xff]
        %v240 = vld [vmem:[%s210 + $0x18] sm:$0xff]
        %v241 = vld [vmem:[%s210 + $0x20] sm:$0xff]
        %v242 = vld [vmem:[%s210 + $0x28] sm:$0xff]
        %v243 = vld [vmem:[%s210 + $0x30] sm:$0xff]
        %v244 = vld [vmem:[%s210 + $0x38] sm:$0xff]
        %v245 = vld [vmem:[%s210 + $0x40] sm:$0xff]
        %v246 = vld [vmem:[%s210 + $0x48] sm:$0xff]
        %v247 = vld [vmem:[%s210 + $0x50] sm:$0xff]
        %v248 = vld [vmem:[%s210 + $0x58] sm:$0xff]
        %v249 = vld [vmem:[%s210 + $0x60] sm:$0xff]
        %v250 = vld [vmem:[%s210 + $0x68] sm:$0xff]
        %v251 = vld [vmem:[%s210 + $0x70] sm:$0xff]
        %v252 = vld [vmem:[%s210 + $0x78] sm:$0xff]
        %v253 = vadd.f32 %v237, %v238
        %254 = vadd.xlane.f32.xlu0 %v253
        %v255 = vpop.xlane.xlu0 %254
        %v256 = vadd.f32 %v239, %v240
        %257 = vadd.xlane.f32.xlu0 %v256
        %v258 = vpop.xlane.xlu0 %257
        %v259 = vadd.f32 %v241, %v242
        %260 = vadd.xlane.f32.xlu0 %v259
        %v261 = vpop.xlane.xlu0 %260
        %v262 = vadd.f32 %v243, %v244
        %263 = vadd.xlane.f32.xlu0 %v262
        %v264 = vpop.xlane.xlu0 %263
        %v265 = vadd.f32 %v245, %v246
        %266 = vadd.xlane.f32.xlu0 %v265
        %v267 = vpop.xlane.xlu0 %266
        %v268 = vadd.f32 %v247, %v248
        %269 = vadd.xlane.f32.xlu0 %v268
        %v270 = vpop.xlane.xlu0 %269
        %v271 = vadd.f32 %v249, %v250
        %272 = vadd.xlane.f32.xlu0 %v271
        %v273 = vpop.xlane.xlu0 %272
        %v274 = vadd.f32 %v251, %v252
        %275 = vadd.xlane.f32.xlu0 %v274
        %v276 = vpop.xlane.xlu0 %275
        %v277 = vmul.f32 %v237, %v237
        %v278 = vmul.f32 %v238, %v238
        %v279 = vmul.f32 %v239, %v239
        %v280 = vmul.f32 %v240, %v240
        %v281 = vmul.f32 %v241, %v241
        %v282 = vmul.f32 %v242, %v242
        %v283 = vmul.f32 %v243, %v243
        %v284 = vmul.f32 %v244, %v244
        %v285 = vmul.f32 %v245, %v245
        %v286 = vmul.f32 %v246, %v246
        %v287 = vmul.f32 %v247, %v247
        %v288 = vmul.f32 %v248, %v248
        %v289 = vmul.f32 %v249, %v249
        %v290 = vmul.f32 %v250, %v250
        %v291 = vmul.f32 %v251, %v251
        %v292 = vmul.f32 %v252, %v252
        %v293 = vadd.f32 %v277, %v278
        %294 = vadd.xlane.f32.xlu0 %v293
        %v295 = vpop.xlane.xlu0 %294
        %v296 = vadd.f32 %v279, %v280
        %297 = vadd.xlane.f32.xlu0 %v296
        %v298 = vpop.xlane.xlu0 %297
        %v299 = vadd.f32 %v281, %v282
        %300 = vadd.xlane.f32.xlu0 %v299
        %v301 = vpop.xlane.xlu0 %300
        %v302 = vadd.f32 %v283, %v284
        %303 = vadd.xlane.f32.xlu0 %v302
        %v304 = vpop.xlane.xlu0 %303
        %v305 = vadd.f32 %v285, %v286
        %306 = vadd.xlane.f32.xlu0 %v305
        %v307 = vpop.xlane.xlu0 %306
        %v308 = vadd.f32 %v287, %v288
        %309 = vadd.xlane.f32.xlu0 %v308
        %v310 = vpop.xlane.xlu0 %309
        %v311 = vadd.f32 %v289, %v290
        %312 = vadd.xlane.f32.xlu0 %v311
        %v313 = vpop.xlane.xlu0 %312
        %v314 = vadd.f32 %v291, %v292
        %315 = vadd.xlane.f32.xlu0 %v314
        %v316 = vpop.xlane.xlu0 %315
        %v317 = vld [vmem:[%s1] sm:$0xff]
        %v318 = vld [vmem:[%s1 + $0x8] sm:$0xff]
        %v319 = vld [vmem:[%s1 + $0x10] sm:$0xff]
        %v320 = vld [vmem:[%s1 + $0x18] sm:$0xff]
        %v321 = vld [vmem:[%s1 + $0x20] sm:$0xff]
        %v322 = vld [vmem:[%s1 + $0x28] sm:$0xff]
        %v323 = vld [vmem:[%s1 + $0x30] sm:$0xff]
        %v324 = vld [vmem:[%s1 + $0x38] sm:$0xff]
        %vm325 = vcmask 523264
        %v327 = vsel %vm325, %v317, 0
        %v330 = vsel %vm325, %v318, 0
        %v333 = vsel %vm325, %v319, 0
        %v336 = vsel %vm325, %v320, 0
        %v339 = vsel %vm325, %v321, 0
        %v342 = vsel %vm325, %v322, 0
        %v345 = vsel %vm325, %v323, 0
        %v348 = vsel %vm325, %v324, 0
        %350 = vmatprep.subr.mxu0 0.0
        %351 = vmatpush1.msra.mxu0 0.0
        %352 = vmatprep.subr.mxu0 0.0
        %353 = vmatpush1.msra.mxu0 0.0
        %354 = vmatprep.subr.mxu0 0.0
        %355 = vmatpush1.msra.mxu0 0.0
        %356 = vmatprep.subr.mxu0 0.0
        %357 = vmatpush1.msra.mxu0 0.0
        %358 = vmatprep.subr.mxu0 0.0
        %359 = vmatpush1.msra.mxu0 0.0
        %360 = vmatprep.subr.mxu0 0.0
        %361 = vmatpush1.msra.mxu0 0.0
        %362 = vmatprep.subr.mxu0 0.0
        %363 = vmatpush1.msra.mxu0 0.0
        %364 = vmatprep.subr.mxu0 0.0
        %365 = vmatpush1.msra.mxu0 0.0
        %366 = vmatprep.subr.mxu0 0.0
        %v367 = vand.u32 %v276, 4294901760
        %368 = vmatpush1.msra.mxu0 %v367
        %369 = vmatprep.subr.mxu0 0.0
        %v370 = vand.u32 %v273, 4294901760
        %371 = vmatpush1.msra.mxu0 %v370
        %372 = vmatprep.subr.mxu0 0.0
        %v373 = vand.u32 %v270, 4294901760
        %374 = vmatpush1.msra.mxu0 %v373
        %375 = vmatprep.subr.mxu0 0.0
        %v376 = vand.u32 %v267, 4294901760
        %377 = vmatpush1.msra.mxu0 %v376
        %378 = vmatprep.subr.mxu0 0.0
        %v379 = vand.u32 %v264, 4294901760
        %380 = vmatpush1.msra.mxu0 %v379
        %381 = vmatprep.subr.mxu0 0.0
        %v382 = vand.u32 %v261, 4294901760
        %383 = vmatpush1.msra.mxu0 %v382
        %384 = vmatprep.subr.mxu0 0.0
        %v385 = vand.u32 %v258, 4294901760
        %386 = vmatpush1.msra.mxu0 %v385
        %387 = vmatprep.subr.mxu0 0.0
        %v388 = vand.u32 %v255, 4294901760
        %389 = vmatpush1.msra.mxu0 %v388
        %390 = vmatprep.subr.mxu0 0.0
        %391 = vmatpush2.msra.mxu0 0.0
        %392 = vmatprep.subr.mxu0 0.0
        %393 = vmatpush2.msra.mxu0 0.0
        %394 = vmatprep.subr.mxu0 0.0
        %395 = vmatpush2.msra.mxu0 0.0
        %396 = vmatprep.subr.mxu0 0.0
        %397 = vmatpush2.msra.mxu0 0.0
        %398 = vmatprep.subr.mxu0 0.0
        %399 = vmatpush2.msra.mxu0 0.0
        %400 = vmatprep.subr.mxu0 0.0
        %401 = vmatpush2.msra.mxu0 0.0
        %402 = vmatprep.subr.mxu0 0.0
        %403 = vmatpush2.msra.mxu0 0.0
        %404 = vmatprep.subr.mxu0 0.0
        %405 = vmatpush2.msra.mxu0 0.0
        %406 = vmatprep.subr.mxu0 0.0
        %407 = vmatpush2.msra.mxu0 0.0
        %408 = vmatprep.subr.mxu0 0.0
        %409 = vmatpush2.msra.mxu0 0.0
        %410 = vmatprep.subr.mxu0 0.0
        %411 = vmatpush2.msra.mxu0 0.0
        %412 = vmatprep.subr.mxu0 0.0
        %413 = vmatpush2.msra.mxu0 0.0
        %414 = vmatprep.subr.mxu0 0.0
        %415 = vmatpush2.msra.mxu0 0.0
        %416 = vmatprep.subr.mxu0 0.0
        %417 = vmatpush2.msra.mxu0 0.0
        %418 = vmatprep.subr.mxu0 0.0
        %419 = vmatpush2.msra.mxu0 0.0
        %420 = vmatprep.subr.mxu0 0.0
        %421 = vmatpush2.msra.mxu0 0.0
        %422 = vmatprep.mubr.f32.mxu0 0.0
        %v423 = vand.u32 %v327, 4294901760
        %v424 = vsub.f32 %v327, %v423
        %v425 = vand.u32 %v424, 4294901760
        %v426 = vsub.f32 %v424, %v425
        %v427 = vand.u32 %v426, 4294901760
        %428 = vmatmul.mubr.f32.gmra.mxu0 %v427
        %v429 = vpop.f32.mrf.mxu0
        %v430 = vadd.f32 0.0, %v429
        %v431 = vpop.f32.mrf.mxu0
        %432 = vmatprep.mubr.f32.mxu0 0.0
        %v433 = vand.u32 %v330, 4294901760
        %v434 = vsub.f32 %v330, %v433
        %v435 = vand.u32 %v434, 4294901760
        %v436 = vsub.f32 %v434, %v435
        %v437 = vand.u32 %v436, 4294901760
        %438 = vmatmul.mubr.f32.gmra.mxu0 %v437
        %v439 = vpop.f32.mrf.mxu0
        %v440 = vadd.f32 0.0, %v439
        %v441 = vpop.f32.mrf.mxu0
        %442 = vmatprep.mubr.f32.mxu0 0.0
        %v443 = vand.u32 %v333, 4294901760
        %v444 = vsub.f32 %v333, %v443
        %v445 = vand.u32 %v444, 4294901760
        %v446 = vsub.f32 %v444, %v445
        %v447 = vand.u32 %v446, 4294901760
        %448 = vmatmul.mubr.f32.gmra.mxu0 %v447
        %v449 = vpop.f32.mrf.mxu0
        %v450 = vadd.f32 0.0, %v449
        %v451 = vpop.f32.mrf.mxu0
        %452 = vmatprep.mubr.f32.mxu0 0.0
        %v453 = vand.u32 %v336, 4294901760
        %v454 = vsub.f32 %v336, %v453
        %v455 = vand.u32 %v454, 4294901760
        %v456 = vsub.f32 %v454, %v455
        %v457 = vand.u32 %v456, 4294901760
        %458 = vmatmul.mubr.f32.gmra.mxu0 %v457
        %v459 = vpop.f32.mrf.mxu0
        %v460 = vadd.f32 0.0, %v459
        %v461 = vpop.f32.mrf.mxu0
        %462 = vmatprep.mubr.f32.mxu0 0.0
        %v463 = vand.u32 %v339, 4294901760
        %v464 = vsub.f32 %v339, %v463
        %v465 = vand.u32 %v464, 4294901760
        %v466 = vsub.f32 %v464, %v465
        %v467 = vand.u32 %v466, 4294901760
        %468 = vmatmul.mubr.f32.gmra.mxu0 %v467
        %v469 = vpop.f32.mrf.mxu0
        %v470 = vadd.f32 0.0, %v469
        %v471 = vpop.f32.mrf.mxu0
        %472 = vmatprep.mubr.f32.mxu0 0.0
        %v473 = vand.u32 %v342, 4294901760
        %v474 = vsub.f32 %v342, %v473
        %v475 = vand.u32 %v474, 4294901760
        %v476 = vsub.f32 %v474, %v475
        %v477 = vand.u32 %v476, 4294901760
        %478 = vmatmul.mubr.f32.gmra.mxu0 %v477
        %v479 = vpop.f32.mrf.mxu0
        %v480 = vadd.f32 0.0, %v479
        %v481 = vpop.f32.mrf.mxu0
        %482 = vmatprep.mubr.f32.mxu0 0.0
        %v483 = vand.u32 %v345, 4294901760
        %v484 = vsub.f32 %v345, %v483
        %v485 = vand.u32 %v484, 4294901760
        %v486 = vsub.f32 %v484, %v485
        %v487 = vand.u32 %v486, 4294901760
        %488 = vmatmul.mubr.f32.gmra.mxu0 %v487
        %v489 = vpop.f32.mrf.mxu0
        %v490 = vadd.f32 0.0, %v489
        %v491 = vpop.f32.mrf.mxu0
        %492 = vmatprep.mubr.f32.mxu0 0.0
        %v493 = vand.u32 %v348, 4294901760
        %v494 = vsub.f32 %v348, %v493
        %v495 = vand.u32 %v494, 4294901760
        %v496 = vsub.f32 %v494, %v495
        %v497 = vand.u32 %v496, 4294901760
        %498 = vmatmul.mubr.f32.gmra.mxu0 %v497
        %v499 = vpop.f32.mrf.mxu0
        %v500 = vadd.f32 0.0, %v499
        %v501 = vpop.f32.mrf.mxu0
        %502 = vdwg.mxu0
        %503 = vmatprep.subr.mxu0 0.0
        %504 = vmatpush1.msra.mxu0 0.0
        %505 = vmatprep.subr.mxu0 0.0
        %506 = vmatpush1.msra.mxu0 0.0
        %507 = vmatprep.subr.mxu0 0.0
        %508 = vmatpush1.msra.mxu0 0.0
        %509 = vmatprep.subr.mxu0 0.0
        %510 = vmatpush1.msra.mxu0 0.0
        %511 = vmatprep.subr.mxu0 0.0
        %512 = vmatpush1.msra.mxu0 0.0
        %513 = vmatprep.subr.mxu0 0.0
        %514 = vmatpush1.msra.mxu0 0.0
        %515 = vmatprep.subr.mxu0 0.0
        %516 = vmatpush1.msra.mxu0 0.0
        %517 = vmatprep.subr.mxu0 0.0
        %518 = vmatpush1.msra.mxu0 0.0
        %519 = vmatprep.subr.mxu0 0.0
        %v520 = vand.u32 %v276, 4294901760
        %v521 = vsub.f32 %v276, %v520
        %v522 = vand.u32 %v521, 4294901760
        %v523 = vsub.f32 %v521, %v522
        %v524 = vand.u32 %v523, 4294901760
        %525 = vmatpush1.msra.mxu0 %v524
        %526 = vmatprep.subr.mxu0 0.0
        %v527 = vand.u32 %v273, 4294901760
        %v528 = vsub.f32 %v273, %v527
        %v529 = vand.u32 %v528, 4294901760
        %v530 = vsub.f32 %v528, %v529
        %v531 = vand.u32 %v530, 4294901760
        %532 = vmatpush1.msra.mxu0 %v531
        %533 = vmatprep.subr.mxu0 0.0
        %v534 = vand.u32 %v270, 4294901760
        %v535 = vsub.f32 %v270, %v534
        %v536 = vand.u32 %v535, 4294901760
        %v537 = vsub.f32 %v535, %v536
        %v538 = vand.u32 %v537, 4294901760
        %539 = vmatpush1.msra.mxu0 %v538
        %540 = vmatprep.subr.mxu0 0.0
        %v541 = vand.u32 %v267, 4294901760
        %v542 = vsub.f32 %v267, %v541
        %v543 = vand.u32 %v542, 4294901760
        %v544 = vsub.f32 %v542, %v543
        %v545 = vand.u32 %v544, 4294901760
        %546 = vmatpush1.msra.mxu0 %v545
        %547 = vmatprep.subr.mxu0 0.0
        %v548 = vand.u32 %v264, 4294901760
        %v549 = vsub.f32 %v264, %v548
        %v550 = vand.u32 %v549, 4294901760
        %v551 = vsub.f32 %v549, %v550
        %v552 = vand.u32 %v551, 4294901760
        %553 = vmatpush1.msra.mxu0 %v552
        %554 = vmatprep.subr.mxu0 0.0
        %v555 = vand.u32 %v261, 4294901760
        %v556 = vsub.f32 %v261, %v555
        %v557 = vand.u32 %v556, 4294901760
        %v558 = vsub.f32 %v556, %v557
        %v559 = vand.u32 %v558, 4294901760
        %560 = vmatpush1.msra.mxu0 %v559
        %561 = vmatprep.subr.mxu0 0.0
        %v562 = vand.u32 %v258, 4294901760
        %v563 = vsub.f32 %v258, %v562
        %v564 = vand.u32 %v563, 4294901760
        %v565 = vsub.f32 %v563, %v564
        %v566 = vand.u32 %v565, 4294901760
        %567 = vmatpush1.msra.mxu0 %v566
        %568 = vmatprep.subr.mxu0 0.0
        %v569 = vand.u32 %v255, 4294901760
        %v570 = vsub.f32 %v255, %v569
        %v571 = vand.u32 %v570, 4294901760
        %v572 = vsub.f32 %v570, %v571
        %v573 = vand.u32 %v572, 4294901760
        %574 = vmatpush1.msra.mxu0 %v573
        %575 = vmatprep.subr.mxu0 0.0
        %576 = vmatpush2.msra.mxu0 0.0
        %577 = vmatprep.subr.mxu0 0.0
        %578 = vmatpush2.msra.mxu0 0.0
        %579 = vmatprep.subr.mxu0 0.0
        %580 = vmatpush2.msra.mxu0 0.0
        %581 = vmatprep.subr.mxu0 0.0
        %582 = vmatpush2.msra.mxu0 0.0
        %583 = vmatprep.subr.mxu0 0.0
        %584 = vmatpush2.msra.mxu0 0.0
        %585 = vmatprep.subr.mxu0 0.0
        %586 = vmatpush2.msra.mxu0 0.0
        %587 = vmatprep.subr.mxu0 0.0
        %588 = vmatpush2.msra.mxu0 0.0
        %589 = vmatprep.subr.mxu0 0.0
        %590 = vmatpush2.msra.mxu0 0.0
        %591 = vmatprep.subr.mxu0 0.0
        %592 = vmatpush2.msra.mxu0 0.0
        %593 = vmatprep.subr.mxu0 0.0
        %594 = vmatpush2.msra.mxu0 0.0
        %595 = vmatprep.subr.mxu0 0.0
        %596 = vmatpush2.msra.mxu0 0.0
        %597 = vmatprep.subr.mxu0 0.0
        %598 = vmatpush2.msra.mxu0 0.0
        %599 = vmatprep.subr.mxu0 0.0
        %600 = vmatpush2.msra.mxu0 0.0
        %601 = vmatprep.subr.mxu0 0.0
        %602 = vmatpush2.msra.mxu0 0.0
        %603 = vmatprep.subr.mxu0 0.0
        %604 = vmatpush2.msra.mxu0 0.0
        %605 = vmatprep.subr.mxu0 0.0
        %606 = vmatpush2.msra.mxu0 0.0
        %607 = vmatprep.mubr.f32.mxu0 0.0
        %v608 = vand.u32 %v327, 4294901760
        %609 = vmatmul.mubr.f32.gmra.mxu0 %v608
        %v610 = vpop.f32.mrf.mxu0
        %v611 = vadd.f32 %v430, %v610
        %v612 = vpop.f32.mrf.mxu0
        %613 = vmatprep.mubr.f32.mxu0 0.0
        %v614 = vand.u32 %v330, 4294901760
        %615 = vmatmul.mubr.f32.gmra.mxu0 %v614
        %v616 = vpop.f32.mrf.mxu0
        %v617 = vadd.f32 %v440, %v616
        %v618 = vpop.f32.mrf.mxu0
        %619 = vmatprep.mubr.f32.mxu0 0.0
        %v620 = vand.u32 %v333, 4294901760
        %621 = vmatmul.mubr.f32.gmra.mxu0 %v620
        %v622 = vpop.f32.mrf.mxu0
        %v623 = vadd.f32 %v450, %v622
        %v624 = vpop.f32.mrf.mxu0
        %625 = vmatprep.mubr.f32.mxu0 0.0
        %v626 = vand.u32 %v336, 4294901760
        %627 = vmatmul.mubr.f32.gmra.mxu0 %v626
        %v628 = vpop.f32.mrf.mxu0
        %v629 = vadd.f32 %v460, %v628
        %v630 = vpop.f32.mrf.mxu0
        %631 = vmatprep.mubr.f32.mxu0 0.0
        %v632 = vand.u32 %v339, 4294901760
        %633 = vmatmul.mubr.f32.gmra.mxu0 %v632
        %v634 = vpop.f32.mrf.mxu0
        %v635 = vadd.f32 %v470, %v634
        %v636 = vpop.f32.mrf.mxu0
        %637 = vmatprep.mubr.f32.mxu0 0.0
        %v638 = vand.u32 %v342, 4294901760
        %639 = vmatmul.mubr.f32.gmra.mxu0 %v638
        %v640 = vpop.f32.mrf.mxu0
        %v641 = vadd.f32 %v480, %v640
        %v642 = vpop.f32.mrf.mxu0
        %643 = vmatprep.mubr.f32.mxu0 0.0
        %v644 = vand.u32 %v345, 4294901760
        %645 = vmatmul.mubr.f32.gmra.mxu0 %v644
        %v646 = vpop.f32.mrf.mxu0
        %v647 = vadd.f32 %v490, %v646
        %v648 = vpop.f32.mrf.mxu0
        %649 = vmatprep.mubr.f32.mxu0 0.0
        %v650 = vand.u32 %v348, 4294901760
        %651 = vmatmul.mubr.f32.gmra.mxu0 %v650
        %v652 = vpop.f32.mrf.mxu0
        %v653 = vadd.f32 %v500, %v652
        %v654 = vpop.f32.mrf.mxu0
        %655 = vdwg.mxu0
        %656 = vmatprep.subr.mxu0 0.0
        %657 = vmatpush1.msra.mxu0 0.0
        %658 = vmatprep.subr.mxu0 0.0
        %659 = vmatpush1.msra.mxu0 0.0
        %660 = vmatprep.subr.mxu0 0.0
        %661 = vmatpush1.msra.mxu0 0.0
        %662 = vmatprep.subr.mxu0 0.0
        %663 = vmatpush1.msra.mxu0 0.0
        %664 = vmatprep.subr.mxu0 0.0
        %665 = vmatpush1.msra.mxu0 0.0
        %666 = vmatprep.subr.mxu0 0.0
        %667 = vmatpush1.msra.mxu0 0.0
        %668 = vmatprep.subr.mxu0 0.0
        %669 = vmatpush1.msra.mxu0 0.0
        %670 = vmatprep.subr.mxu0 0.0
        %671 = vmatpush1.msra.mxu0 0.0
        %672 = vmatprep.subr.mxu0 0.0
        %v673 = vand.u32 %v276, 4294901760
        %v674 = vsub.f32 %v276, %v673
        %675 = vmatpush1.msra.mxu0 %v674
        %676 = vmatprep.subr.mxu0 0.0
        %v677 = vand.u32 %v273, 4294901760
        %v678 = vsub.f32 %v273, %v677
        %679 = vmatpush1.msra.mxu0 %v678
        %680 = vmatprep.subr.mxu0 0.0
        %v681 = vand.u32 %v270, 4294901760
        %v682 = vsub.f32 %v270, %v681
        %683 = vmatpush1.msra.mxu0 %v682
        %684 = vmatprep.subr.mxu0 0.0
        %v685 = vand.u32 %v267, 4294901760
        %v686 = vsub.f32 %v267, %v685
        %687 = vmatpush1.msra.mxu0 %v686
        %688 = vmatprep.subr.mxu0 0.0
        %v689 = vand.u32 %v264, 4294901760
        %v690 = vsub.f32 %v264, %v689
        %691 = vmatpush1.msra.mxu0 %v690
        %692 = vmatprep.subr.mxu0 0.0
        %v693 = vand.u32 %v261, 4294901760
        %v694 = vsub.f32 %v261, %v693
        %695 = vmatpush1.msra.mxu0 %v694
        %696 = vmatprep.subr.mxu0 0.0
        %v697 = vand.u32 %v258, 4294901760
        %v698 = vsub.f32 %v258, %v697
        %699 = vmatpush1.msra.mxu0 %v698
        %700 = vmatprep.subr.mxu0 0.0
        %v701 = vand.u32 %v255, 4294901760
        %v702 = vsub.f32 %v255, %v701
        %703 = vmatpush1.msra.mxu0 %v702
        %704 = vmatprep.subr.mxu0 0.0
        %705 = vmatpush2.msra.mxu0 0.0
        %706 = vmatprep.subr.mxu0 0.0
        %707 = vmatpush2.msra.mxu0 0.0
        %708 = vmatprep.subr.mxu0 0.0
        %709 = vmatpush2.msra.mxu0 0.0
        %710 = vmatprep.subr.mxu0 0.0
        %711 = vmatpush2.msra.mxu0 0.0
        %712 = vmatprep.subr.mxu0 0.0
        %713 = vmatpush2.msra.mxu0 0.0
        %714 = vmatprep.subr.mxu0 0.0
        %715 = vmatpush2.msra.mxu0 0.0
        %716 = vmatprep.subr.mxu0 0.0
        %717 = vmatpush2.msra.mxu0 0.0
        %718 = vmatprep.subr.mxu0 0.0
        %719 = vmatpush2.msra.mxu0 0.0
        %720 = vmatprep.subr.mxu0 0.0
        %721 = vmatpush2.msra.mxu0 0.0
        %722 = vmatprep.subr.mxu0 0.0
        %723 = vmatpush2.msra.mxu0 0.0
        %724 = vmatprep.subr.mxu0 0.0
        %725 = vmatpush2.msra.mxu0 0.0
        %726 = vmatprep.subr.mxu0 0.0
        %727 = vmatpush2.msra.mxu0 0.0
        %728 = vmatprep.subr.mxu0 0.0
        %729 = vmatpush2.msra.mxu0 0.0
        %730 = vmatprep.subr.mxu0 0.0
        %731 = vmatpush2.msra.mxu0 0.0
        %732 = vmatprep.subr.mxu0 0.0
        %733 = vmatpush2.msra.mxu0 0.0
        %734 = vmatprep.subr.mxu0 0.0
        %735 = vmatpush2.msra.mxu0 0.0
        %736 = vmatprep.mubr.f32.mxu0 0.0
        %v737 = vand.u32 %v327, 4294901760
        %v738 = vsub.f32 %v327, %v737
        %739 = vmatmul.mubr.f32.gmra.mxu0 %v738
        %v740 = vpop.f32.mrf.mxu0
        %v741 = vadd.f32 %v611, %v740
        %v742 = vpop.f32.mrf.mxu0
        %743 = vmatprep.mubr.f32.mxu0 0.0
        %v744 = vand.u32 %v330, 4294901760
        %v745 = vsub.f32 %v330, %v744
        %746 = vmatmul.mubr.f32.gmra.mxu0 %v745
        %v747 = vpop.f32.mrf.mxu0
        %v748 = vadd.f32 %v617, %v747
        %v749 = vpop.f32.mrf.mxu0
        %750 = vmatprep.mubr.f32.mxu0 0.0
        %v751 = vand.u32 %v333, 4294901760
        %v752 = vsub.f32 %v333, %v751
        %753 = vmatmul.mubr.f32.gmra.mxu0 %v752
        %v754 = vpop.f32.mrf.mxu0
        %v755 = vadd.f32 %v623, %v754
        %v756 = vpop.f32.mrf.mxu0
        %757 = vmatprep.mubr.f32.mxu0 0.0
        %v758 = vand.u32 %v336, 4294901760
        %v759 = vsub.f32 %v336, %v758
        %760 = vmatmul.mubr.f32.gmra.mxu0 %v759
        %v761 = vpop.f32.mrf.mxu0
        %v762 = vadd.f32 %v629, %v761
        %v763 = vpop.f32.mrf.mxu0
        %764 = vmatprep.mubr.f32.mxu0 0.0
        %v765 = vand.u32 %v339, 4294901760
        %v766 = vsub.f32 %v339, %v765
        %767 = vmatmul.mubr.f32.gmra.mxu0 %v766
        %v768 = vpop.f32.mrf.mxu0
        %v769 = vadd.f32 %v635, %v768
        %v770 = vpop.f32.mrf.mxu0
        %771 = vmatprep.mubr.f32.mxu0 0.0
        %v772 = vand.u32 %v342, 4294901760
        %v773 = vsub.f32 %v342, %v772
        %774 = vmatmul.mubr.f32.gmra.mxu0 %v773
        %v775 = vpop.f32.mrf.mxu0
        %v776 = vadd.f32 %v641, %v775
        %v777 = vpop.f32.mrf.mxu0
        %778 = vmatprep.mubr.f32.mxu0 0.0
        %v779 = vand.u32 %v345, 4294901760
        %v780 = vsub.f32 %v345, %v779
        %781 = vmatmul.mubr.f32.gmra.mxu0 %v780
        %v782 = vpop.f32.mrf.mxu0
        %v783 = vadd.f32 %v647, %v782
        %v784 = vpop.f32.mrf.mxu0
        %785 = vmatprep.mubr.f32.mxu0 0.0
        %v786 = vand.u32 %v348, 4294901760
        %v787 = vsub.f32 %v348, %v786
        %788 = vmatmul.mubr.f32.gmra.mxu0 %v787
        %v789 = vpop.f32.mrf.mxu0
        %v790 = vadd.f32 %v653, %v789
        %v791 = vpop.f32.mrf.mxu0
        %792 = vdwg.mxu0
        %793 = vmatprep.subr.mxu0 0.0
        %794 = vmatpush1.msra.mxu0 0.0
        %795 = vmatprep.subr.mxu0 0.0
        %796 = vmatpush1.msra.mxu0 0.0
        %797 = vmatprep.subr.mxu0 0.0
        %798 = vmatpush1.msra.mxu0 0.0
        %799 = vmatprep.subr.mxu0 0.0
        %800 = vmatpush1.msra.mxu0 0.0
        %801 = vmatprep.subr.mxu0 0.0
        %802 = vmatpush1.msra.mxu0 0.0
        %803 = vmatprep.subr.mxu0 0.0
        %804 = vmatpush1.msra.mxu0 0.0
        %805 = vmatprep.subr.mxu0 0.0
        %806 = vmatpush1.msra.mxu0 0.0
        %807 = vmatprep.subr.mxu0 0.0
        %808 = vmatpush1.msra.mxu0 0.0
        %809 = vmatprep.subr.mxu0 0.0
        %v810 = vand.u32 %v276, 4294901760
        %811 = vmatpush1.msra.mxu0 %v810
        %812 = vmatprep.subr.mxu0 0.0
        %v813 = vand.u32 %v273, 4294901760
        %814 = vmatpush1.msra.mxu0 %v813
        %815 = vmatprep.subr.mxu0 0.0
        %v816 = vand.u32 %v270, 4294901760
        %817 = vmatpush1.msra.mxu0 %v816
        %818 = vmatprep.subr.mxu0 0.0
        %v819 = vand.u32 %v267, 4294901760
        %820 = vmatpush1.msra.mxu0 %v819
        %821 = vmatprep.subr.mxu0 0.0
        %v822 = vand.u32 %v264, 4294901760
        %823 = vmatpush1.msra.mxu0 %v822
        %824 = vmatprep.subr.mxu0 0.0
        %v825 = vand.u32 %v261, 4294901760
        %826 = vmatpush1.msra.mxu0 %v825
        %827 = vmatprep.subr.mxu0 0.0
        %v828 = vand.u32 %v258, 4294901760
        %829 = vmatpush1.msra.mxu0 %v828
        %830 = vmatprep.subr.mxu0 0.0
        %v831 = vand.u32 %v255, 4294901760
        %832 = vmatpush1.msra.mxu0 %v831
        %833 = vmatprep.subr.mxu0 0.0
        %834 = vmatpush2.msra.mxu0 0.0
        %835 = vmatprep.subr.mxu0 0.0
        %836 = vmatpush2.msra.mxu0 0.0
        %837 = vmatprep.subr.mxu0 0.0
        %838 = vmatpush2.msra.mxu0 0.0
        %839 = vmatprep.subr.mxu0 0.0
        %840 = vmatpush2.msra.mxu0 0.0
        %841 = vmatprep.subr.mxu0 0.0
        %842 = vmatpush2.msra.mxu0 0.0
        %843 = vmatprep.subr.mxu0 0.0
        %844 = vmatpush2.msra.mxu0 0.0
        %845 = vmatprep.subr.mxu0 0.0
        %846 = vmatpush2.msra.mxu0 0.0
        %847 = vmatprep.subr.mxu0 0.0
        %848 = vmatpush2.msra.mxu0 0.0
        %849 = vmatprep.subr.mxu0 0.0
        %850 = vmatpush2.msra.mxu0 0.0
        %851 = vmatprep.subr.mxu0 0.0
        %852 = vmatpush2.msra.mxu0 0.0
        %853 = vmatprep.subr.mxu0 0.0
        %854 = vmatpush2.msra.mxu0 0.0
        %855 = vmatprep.subr.mxu0 0.0
        %856 = vmatpush2.msra.mxu0 0.0
        %857 = vmatprep.subr.mxu0 0.0
        %858 = vmatpush2.msra.mxu0 0.0
        %859 = vmatprep.subr.mxu0 0.0
        %860 = vmatpush2.msra.mxu0 0.0
        %861 = vmatprep.subr.mxu0 0.0
        %862 = vmatpush2.msra.mxu0 0.0
        %863 = vmatprep.subr.mxu0 0.0
        %864 = vmatpush2.msra.mxu0 0.0
        %865 = vmatprep.mubr.f32.mxu0 0.0
        %v866 = vand.u32 %v327, 4294901760
        %v867 = vsub.f32 %v327, %v866
        %v868 = vand.u32 %v867, 4294901760
        %869 = vmatmul.mubr.f32.gmra.mxu0 %v868
        %v870 = vpop.f32.mrf.mxu0
        %v871 = vadd.f32 %v741, %v870
        %v872 = vpop.f32.mrf.mxu0
        %873 = vmatprep.mubr.f32.mxu0 0.0
        %v874 = vand.u32 %v330, 4294901760
        %v875 = vsub.f32 %v330, %v874
        %v876 = vand.u32 %v875, 4294901760
        %877 = vmatmul.mubr.f32.gmra.mxu0 %v876
        %v878 = vpop.f32.mrf.mxu0
        %v879 = vadd.f32 %v748, %v878
        %v880 = vpop.f32.mrf.mxu0
        %881 = vmatprep.mubr.f32.mxu0 0.0
        %v882 = vand.u32 %v333, 4294901760
        %v883 = vsub.f32 %v333, %v882
        %v884 = vand.u32 %v883, 4294901760
        %885 = vmatmul.mubr.f32.gmra.mxu0 %v884
        %v886 = vpop.f32.mrf.mxu0
        %v887 = vadd.f32 %v755, %v886
        %v888 = vpop.f32.mrf.mxu0
        %889 = vmatprep.mubr.f32.mxu0 0.0
        %v890 = vand.u32 %v336, 4294901760
        %v891 = vsub.f32 %v336, %v890
        %v892 = vand.u32 %v891, 4294901760
        %893 = vmatmul.mubr.f32.gmra.mxu0 %v892
        %v894 = vpop.f32.mrf.mxu0
        %v895 = vadd.f32 %v762, %v894
        %v896 = vpop.f32.mrf.mxu0
        %897 = vmatprep.mubr.f32.mxu0 0.0
        %v898 = vand.u32 %v339, 4294901760
        %v899 = vsub.f32 %v339, %v898
        %v900 = vand.u32 %v899, 4294901760
        %901 = vmatmul.mubr.f32.gmra.mxu0 %v900
        %v902 = vpop.f32.mrf.mxu0
        %v903 = vadd.f32 %v769, %v902
        %v904 = vpop.f32.mrf.mxu0
        %905 = vmatprep.mubr.f32.mxu0 0.0
        %v906 = vand.u32 %v342, 4294901760
        %v907 = vsub.f32 %v342, %v906
        %v908 = vand.u32 %v907, 4294901760
        %909 = vmatmul.mubr.f32.gmra.mxu0 %v908
        %v910 = vpop.f32.mrf.mxu0
        %v911 = vadd.f32 %v776, %v910
        %v912 = vpop.f32.mrf.mxu0
        %913 = vmatprep.mubr.f32.mxu0 0.0
        %v914 = vand.u32 %v345, 4294901760
        %v915 = vsub.f32 %v345, %v914
        %v916 = vand.u32 %v915, 4294901760
        %917 = vmatmul.mubr.f32.gmra.mxu0 %v916
        %v918 = vpop.f32.mrf.mxu0
        %v919 = vadd.f32 %v783, %v918
        %v920 = vpop.f32.mrf.mxu0
        %921 = vmatprep.mubr.f32.mxu0 0.0
        %v922 = vand.u32 %v348, 4294901760
        %v923 = vsub.f32 %v348, %v922
        %v924 = vand.u32 %v923, 4294901760
        %925 = vmatmul.mubr.f32.gmra.mxu0 %v924
        %v926 = vpop.f32.mrf.mxu0
        %v927 = vadd.f32 %v790, %v926
        %v928 = vpop.f32.mrf.mxu0
        %929 = vdwg.mxu0
        %930 = vmatprep.subr.mxu0 0.0
        %931 = vmatpush1.msra.mxu0 0.0
        %932 = vmatprep.subr.mxu0 0.0
        %933 = vmatpush1.msra.mxu0 0.0
        %934 = vmatprep.subr.mxu0 0.0
        %935 = vmatpush1.msra.mxu0 0.0
        %936 = vmatprep.subr.mxu0 0.0
        %937 = vmatpush1.msra.mxu0 0.0
        %938 = vmatprep.subr.mxu0 0.0
        %939 = vmatpush1.msra.mxu0 0.0
        %940 = vmatprep.subr.mxu0 0.0
        %941 = vmatpush1.msra.mxu0 0.0
        %942 = vmatprep.subr.mxu0 0.0
        %943 = vmatpush1.msra.mxu0 0.0
        %944 = vmatprep.subr.mxu0 0.0
        %945 = vmatpush1.msra.mxu0 0.0
        %946 = vmatprep.subr.mxu0 0.0
        %v947 = vand.u32 %v276, 4294901760
        %v948 = vsub.f32 %v276, %v947
        %v949 = vand.u32 %v948, 4294901760
        %950 = vmatpush1.msra.mxu0 %v949
        %951 = vmatprep.subr.mxu0 0.0
        %v952 = vand.u32 %v273, 4294901760
        %v953 = vsub.f32 %v273, %v952
        %v954 = vand.u32 %v953, 4294901760
        %955 = vmatpush1.msra.mxu0 %v954
        %956 = vmatprep.subr.mxu0 0.0
        %v957 = vand.u32 %v270, 4294901760
        %v958 = vsub.f32 %v270, %v957
        %v959 = vand.u32 %v958, 4294901760
        %960 = vmatpush1.msra.mxu0 %v959
        %961 = vmatprep.subr.mxu0 0.0
        %v962 = vand.u32 %v267, 4294901760
        %v963 = vsub.f32 %v267, %v962
        %v964 = vand.u32 %v963, 4294901760
        %965 = vmatpush1.msra.mxu0 %v964
        %966 = vmatprep.subr.mxu0 0.0
        %v967 = vand.u32 %v264, 4294901760
        %v968 = vsub.f32 %v264, %v967
        %v969 = vand.u32 %v968, 4294901760
        %970 = vmatpush1.msra.mxu0 %v969
        %971 = vmatprep.subr.mxu0 0.0
        %v972 = vand.u32 %v261, 4294901760
        %v973 = vsub.f32 %v261, %v972
        %v974 = vand.u32 %v973, 4294901760
        %975 = vmatpush1.msra.mxu0 %v974
        %976 = vmatprep.subr.mxu0 0.0
        %v977 = vand.u32 %v258, 4294901760
        %v978 = vsub.f32 %v258, %v977
        %v979 = vand.u32 %v978, 4294901760
        %980 = vmatpush1.msra.mxu0 %v979
        %981 = vmatprep.subr.mxu0 0.0
        %v982 = vand.u32 %v255, 4294901760
        %v983 = vsub.f32 %v255, %v982
        %v984 = vand.u32 %v983, 4294901760
        %985 = vmatpush1.msra.mxu0 %v984
        %986 = vmatprep.subr.mxu0 0.0
        %987 = vmatpush2.msra.mxu0 0.0
        %988 = vmatprep.subr.mxu0 0.0
        %989 = vmatpush2.msra.mxu0 0.0
        %990 = vmatprep.subr.mxu0 0.0
        %991 = vmatpush2.msra.mxu0 0.0
        %992 = vmatprep.subr.mxu0 0.0
        %993 = vmatpush2.msra.mxu0 0.0
        %994 = vmatprep.subr.mxu0 0.0
        %995 = vmatpush2.msra.mxu0 0.0
        %996 = vmatprep.subr.mxu0 0.0
        %997 = vmatpush2.msra.mxu0 0.0
        %998 = vmatprep.subr.mxu0 0.0
        %999 = vmatpush2.msra.mxu0 0.0
        %1000 = vmatprep.subr.mxu0 0.0
        %1001 = vmatpush2.msra.mxu0 0.0
        %1002 = vmatprep.subr.mxu0 0.0
        %1003 = vmatpush2.msra.mxu0 0.0
        %1004 = vmatprep.subr.mxu0 0.0
        %1005 = vmatpush2.msra.mxu0 0.0
        %1006 = vmatprep.subr.mxu0 0.0
        %1007 = vmatpush2.msra.mxu0 0.0
        %1008 = vmatprep.subr.mxu0 0.0
        %1009 = vmatpush2.msra.mxu0 0.0
        %1010 = vmatprep.subr.mxu0 0.0
        %1011 = vmatpush2.msra.mxu0 0.0
        %1012 = vmatprep.subr.mxu0 0.0
        %1013 = vmatpush2.msra.mxu0 0.0
        %1014 = vmatprep.subr.mxu0 0.0
        %1015 = vmatpush2.msra.mxu0 0.0
        %1016 = vmatprep.subr.mxu0 0.0
        %1017 = vmatpush2.msra.mxu0 0.0
        %1018 = vmatprep.mubr.f32.mxu0 0.0
        %v1019 = vand.u32 %v327, 4294901760
        %1020 = vmatmul.mubr.f32.gmra.mxu0 %v1019
        %v1021 = vpop.f32.mrf.mxu0
        %v1022 = vadd.f32 %v871, %v1021
        %v1023 = vpop.f32.mrf.mxu0
        %1024 = vmatprep.mubr.f32.mxu0 0.0
        %v1025 = vand.u32 %v330, 4294901760
        %1026 = vmatmul.mubr.f32.gmra.mxu0 %v1025
        %v1027 = vpop.f32.mrf.mxu0
        %v1028 = vadd.f32 %v879, %v1027
        %v1029 = vpop.f32.mrf.mxu0
        %1030 = vmatprep.mubr.f32.mxu0 0.0
        %v1031 = vand.u32 %v333, 4294901760
        %1032 = vmatmul.mubr.f32.gmra.mxu0 %v1031
        %v1033 = vpop.f32.mrf.mxu0
        %v1034 = vadd.f32 %v887, %v1033
        %v1035 = vpop.f32.mrf.mxu0
        %1036 = vmatprep.mubr.f32.mxu0 0.0
        %v1037 = vand.u32 %v336, 4294901760
        %1038 = vmatmul.mubr.f32.gmra.mxu0 %v1037
        %v1039 = vpop.f32.mrf.mxu0
        %v1040 = vadd.f32 %v895, %v1039
        %v1041 = vpop.f32.mrf.mxu0
        %1042 = vmatprep.mubr.f32.mxu0 0.0
        %v1043 = vand.u32 %v339, 4294901760
        %1044 = vmatmul.mubr.f32.gmra.mxu0 %v1043
        %v1045 = vpop.f32.mrf.mxu0
        %v1046 = vadd.f32 %v903, %v1045
        %v1047 = vpop.f32.mrf.mxu0
        %1048 = vmatprep.mubr.f32.mxu0 0.0
        %v1049 = vand.u32 %v342, 4294901760
        %1050 = vmatmul.mubr.f32.gmra.mxu0 %v1049
        %v1051 = vpop.f32.mrf.mxu0
        %v1052 = vadd.f32 %v911, %v1051
        %v1053 = vpop.f32.mrf.mxu0
        %1054 = vmatprep.mubr.f32.mxu0 0.0
        %v1055 = vand.u32 %v345, 4294901760
        %1056 = vmatmul.mubr.f32.gmra.mxu0 %v1055
        %v1057 = vpop.f32.mrf.mxu0
        %v1058 = vadd.f32 %v919, %v1057
        %v1059 = vpop.f32.mrf.mxu0
        %1060 = vmatprep.mubr.f32.mxu0 0.0
        %v1061 = vand.u32 %v348, 4294901760
        %1062 = vmatmul.mubr.f32.gmra.mxu0 %v1061
        %v1063 = vpop.f32.mrf.mxu0
        %v1064 = vadd.f32 %v927, %v1063
        %v1065 = vpop.f32.mrf.mxu0
        %1066 = vdwg.mxu0
        %1067 = vmatprep.subr.mxu0 0.0
        %1068 = vmatpush1.msra.mxu0 0.0
        %1069 = vmatprep.subr.mxu0 0.0
        %1070 = vmatpush1.msra.mxu0 0.0
        %1071 = vmatprep.subr.mxu0 0.0
        %1072 = vmatpush1.msra.mxu0 0.0
        %1073 = vmatprep.subr.mxu0 0.0
        %1074 = vmatpush1.msra.mxu0 0.0
        %1075 = vmatprep.subr.mxu0 0.0
        %1076 = vmatpush1.msra.mxu0 0.0
        %1077 = vmatprep.subr.mxu0 0.0
        %1078 = vmatpush1.msra.mxu0 0.0
        %1079 = vmatprep.subr.mxu0 0.0
        %1080 = vmatpush1.msra.mxu0 0.0
        %1081 = vmatprep.subr.mxu0 0.0
        %1082 = vmatpush1.msra.mxu0 0.0
        %1083 = vmatprep.subr.mxu0 0.0
        %v1084 = vand.u32 %v276, 4294901760
        %1085 = vmatpush1.msra.mxu0 %v1084
        %1086 = vmatprep.subr.mxu0 0.0
        %v1087 = vand.u32 %v273, 4294901760
        %1088 = vmatpush1.msra.mxu0 %v1087
        %1089 = vmatprep.subr.mxu0 0.0
        %v1090 = vand.u32 %v270, 4294901760
        %1091 = vmatpush1.msra.mxu0 %v1090
        %1092 = vmatprep.subr.mxu0 0.0
        %v1093 = vand.u32 %v267, 4294901760
        %1094 = vmatpush1.msra.mxu0 %v1093
        %1095 = vmatprep.subr.mxu0 0.0
        %v1096 = vand.u32 %v264, 4294901760
        %1097 = vmatpush1.msra.mxu0 %v1096
        %1098 = vmatprep.subr.mxu0 0.0
        %v1099 = vand.u32 %v261, 4294901760
        %1100 = vmatpush1.msra.mxu0 %v1099
        %1101 = vmatprep.subr.mxu0 0.0
        %v1102 = vand.u32 %v258, 4294901760
        %1103 = vmatpush1.msra.mxu0 %v1102
        %1104 = vmatprep.subr.mxu0 0.0
        %v1105 = vand.u32 %v255, 4294901760
        %1106 = vmatpush1.msra.mxu0 %v1105
        %1107 = vmatprep.subr.mxu0 0.0
        %1108 = vmatpush2.msra.mxu0 0.0
        %1109 = vmatprep.subr.mxu0 0.0
        %1110 = vmatpush2.msra.mxu0 0.0
        %1111 = vmatprep.subr.mxu0 0.0
        %1112 = vmatpush2.msra.mxu0 0.0
        %1113 = vmatprep.subr.mxu0 0.0
        %1114 = vmatpush2.msra.mxu0 0.0
        %1115 = vmatprep.subr.mxu0 0.0
        %1116 = vmatpush2.msra.mxu0 0.0
        %1117 = vmatprep.subr.mxu0 0.0
        %1118 = vmatpush2.msra.mxu0 0.0
        %1119 = vmatprep.subr.mxu0 0.0
        %1120 = vmatpush2.msra.mxu0 0.0
        %1121 = vmatprep.subr.mxu0 0.0
        %1122 = vmatpush2.msra.mxu0 0.0
        %1123 = vmatprep.subr.mxu0 0.0
        %1124 = vmatpush2.msra.mxu0 0.0
        %1125 = vmatprep.subr.mxu0 0.0
        %1126 = vmatpush2.msra.mxu0 0.0
        %1127 = vmatprep.subr.mxu0 0.0
        %1128 = vmatpush2.msra.mxu0 0.0
        %1129 = vmatprep.subr.mxu0 0.0
        %1130 = vmatpush2.msra.mxu0 0.0
        %1131 = vmatprep.subr.mxu0 0.0
        %1132 = vmatpush2.msra.mxu0 0.0
        %1133 = vmatprep.subr.mxu0 0.0
        %1134 = vmatpush2.msra.mxu0 0.0
        %1135 = vmatprep.subr.mxu0 0.0
        %1136 = vmatpush2.msra.mxu0 0.0
        %1137 = vmatprep.subr.mxu0 0.0
        %1138 = vmatpush2.msra.mxu0 0.0
        %1139 = vmatprep.mubr.f32.mxu0 0.0
        %v1140 = vand.u32 %v327, 4294901760
        %1141 = vmatmul.mubr.f32.gmra.mxu0 %v1140
        %v1142 = vpop.f32.mrf.mxu0
        %v1143 = vadd.f32 %v1022, %v1142
        %v1144 = vpop.f32.mrf.mxu0
        %1145 = vmatprep.mubr.f32.mxu0 0.0
        %v1146 = vand.u32 %v330, 4294901760
        %1147 = vmatmul.mubr.f32.gmra.mxu0 %v1146
        %v1148 = vpop.f32.mrf.mxu0
        %v1149 = vadd.f32 %v1028, %v1148
        %v1150 = vpop.f32.mrf.mxu0
        %1151 = vmatprep.mubr.f32.mxu0 0.0
        %v1152 = vand.u32 %v333, 4294901760
        %1153 = vmatmul.mubr.f32.gmra.mxu0 %v1152
        %v1154 = vpop.f32.mrf.mxu0
        %v1155 = vadd.f32 %v1034, %v1154
        %v1156 = vpop.f32.mrf.mxu0
        %1157 = vmatprep.mubr.f32.mxu0 0.0
        %v1158 = vand.u32 %v336, 4294901760
        %1159 = vmatmul.mubr.f32.gmra.mxu0 %v1158
        %v1160 = vpop.f32.mrf.mxu0
        %v1161 = vadd.f32 %v1040, %v1160
        %v1162 = vpop.f32.mrf.mxu0
        %1163 = vmatprep.mubr.f32.mxu0 0.0
        %v1164 = vand.u32 %v339, 4294901760
        %1165 = vmatmul.mubr.f32.gmra.mxu0 %v1164
        %v1166 = vpop.f32.mrf.mxu0
        %v1167 = vadd.f32 %v1046, %v1166
        %v1168 = vpop.f32.mrf.mxu0
        %1169 = vmatprep.mubr.f32.mxu0 0.0
        %v1170 = vand.u32 %v342, 4294901760
        %1171 = vmatmul.mubr.f32.gmra.mxu0 %v1170
        %v1172 = vpop.f32.mrf.mxu0
        %v1173 = vadd.f32 %v1052, %v1172
        %v1174 = vpop.f32.mrf.mxu0
        %1175 = vmatprep.mubr.f32.mxu0 0.0
        %v1176 = vand.u32 %v345, 4294901760
        %1177 = vmatmul.mubr.f32.gmra.mxu0 %v1176
        %v1178 = vpop.f32.mrf.mxu0
        %v1179 = vadd.f32 %v1058, %v1178
        %v1180 = vpop.f32.mrf.mxu0
        %1181 = vmatprep.mubr.f32.mxu0 0.0
        %v1182 = vand.u32 %v348, 4294901760
        %1183 = vmatmul.mubr.f32.gmra.mxu0 %v1182
        %v1184 = vpop.f32.mrf.mxu0
        %v1185 = vadd.f32 %v1064, %v1184
        %v1186 = vpop.f32.mrf.mxu0
        %1187 = vdwg.mxu0
        %1188 = vmatprep.subr.mxu0 0.0
        %1189 = vmatpush1.msra.mxu0 0.0
        %1190 = vmatprep.subr.mxu0 0.0
        %1191 = vmatpush1.msra.mxu0 0.0
        %1192 = vmatprep.subr.mxu0 0.0
        %1193 = vmatpush1.msra.mxu0 0.0
        %1194 = vmatprep.subr.mxu0 0.0
        %1195 = vmatpush1.msra.mxu0 0.0
        %1196 = vmatprep.subr.mxu0 0.0
        %1197 = vmatpush1.msra.mxu0 0.0
        %1198 = vmatprep.subr.mxu0 0.0
        %1199 = vmatpush1.msra.mxu0 0.0
        %1200 = vmatprep.subr.mxu0 0.0
        %1201 = vmatpush1.msra.mxu0 0.0
        %1202 = vmatprep.subr.mxu0 0.0
        %1203 = vmatpush1.msra.mxu0 0.0
        %1204 = vmatprep.subr.mxu0 0.0
        %v1205 = vand.u32 %v316, 4294901760
        %1206 = vmatpush1.msra.mxu0 %v1205
        %1207 = vmatprep.subr.mxu0 0.0
        %v1208 = vand.u32 %v313, 4294901760
        %1209 = vmatpush1.msra.mxu0 %v1208
        %1210 = vmatprep.subr.mxu0 0.0
        %v1211 = vand.u32 %v310, 4294901760
        %1212 = vmatpush1.msra.mxu0 %v1211
        %1213 = vmatprep.subr.mxu0 0.0
        %v1214 = vand.u32 %v307, 4294901760
        %1215 = vmatpush1.msra.mxu0 %v1214
        %1216 = vmatprep.subr.mxu0 0.0
        %v1217 = vand.u32 %v304, 4294901760
        %1218 = vmatpush1.msra.mxu0 %v1217
        %1219 = vmatprep.subr.mxu0 0.0
        %v1220 = vand.u32 %v301, 4294901760
        %1221 = vmatpush1.msra.mxu0 %v1220
        %1222 = vmatprep.subr.mxu0 0.0
        %v1223 = vand.u32 %v298, 4294901760
        %1224 = vmatpush1.msra.mxu0 %v1223
        %1225 = vmatprep.subr.mxu0 0.0
        %v1226 = vand.u32 %v295, 4294901760
        %1227 = vmatpush1.msra.mxu0 %v1226
        %1228 = vmatprep.subr.mxu0 0.0
        %1229 = vmatpush2.msra.mxu0 0.0
        %1230 = vmatprep.subr.mxu0 0.0
        %1231 = vmatpush2.msra.mxu0 0.0
        %1232 = vmatprep.subr.mxu0 0.0
        %1233 = vmatpush2.msra.mxu0 0.0
        %1234 = vmatprep.subr.mxu0 0.0
        %1235 = vmatpush2.msra.mxu0 0.0
        %1236 = vmatprep.subr.mxu0 0.0
        %1237 = vmatpush2.msra.mxu0 0.0
        %1238 = vmatprep.subr.mxu0 0.0
        %1239 = vmatpush2.msra.mxu0 0.0
        %1240 = vmatprep.subr.mxu0 0.0
        %1241 = vmatpush2.msra.mxu0 0.0
        %1242 = vmatprep.subr.mxu0 0.0
        %1243 = vmatpush2.msra.mxu0 0.0
        %1244 = vmatprep.subr.mxu0 0.0
        %1245 = vmatpush2.msra.mxu0 0.0
        %1246 = vmatprep.subr.mxu0 0.0
        %1247 = vmatpush2.msra.mxu0 0.0
        %1248 = vmatprep.subr.mxu0 0.0
        %1249 = vmatpush2.msra.mxu0 0.0
        %1250 = vmatprep.subr.mxu0 0.0
        %1251 = vmatpush2.msra.mxu0 0.0
        %1252 = vmatprep.subr.mxu0 0.0
        %1253 = vmatpush2.msra.mxu0 0.0
        %1254 = vmatprep.subr.mxu0 0.0
        %1255 = vmatpush2.msra.mxu0 0.0
        %1256 = vmatprep.subr.mxu0 0.0
        %1257 = vmatpush2.msra.mxu0 0.0
        %1258 = vmatprep.subr.mxu0 0.0
        %1259 = vmatpush2.msra.mxu0 0.0
        %1260 = vmatprep.mubr.f32.mxu0 0.0
        %v1261 = vand.u32 %v327, 4294901760
        %v1262 = vsub.f32 %v327, %v1261
        %v1263 = vand.u32 %v1262, 4294901760
        %v1264 = vsub.f32 %v1262, %v1263
        %v1265 = vand.u32 %v1264, 4294901760
        %1266 = vmatmul.mubr.f32.gmra.mxu0 %v1265
        %v1267 = vpop.f32.mrf.mxu0
        %v1268 = vadd.f32 0.0, %v1267
        %v1269 = vpop.f32.mrf.mxu0
        %1270 = vmatprep.mubr.f32.mxu0 0.0
        %v1271 = vand.u32 %v330, 4294901760
        %v1272 = vsub.f32 %v330, %v1271
        %v1273 = vand.u32 %v1272, 4294901760
        %v1274 = vsub.f32 %v1272, %v1273
        %v1275 = vand.u32 %v1274, 4294901760
        %1276 = vmatmul.mubr.f32.gmra.mxu0 %v1275
        %v1277 = vpop.f32.mrf.mxu0
        %v1278 = vadd.f32 0.0, %v1277
        %v1279 = vpop.f32.mrf.mxu0
        %1280 = vmatprep.mubr.f32.mxu0 0.0
        %v1281 = vand.u32 %v333, 4294901760
        %v1282 = vsub.f32 %v333, %v1281
        %v1283 = vand.u32 %v1282, 4294901760
        %v1284 = vsub.f32 %v1282, %v1283
        %v1285 = vand.u32 %v1284, 4294901760
        %1286 = vmatmul.mubr.f32.gmra.mxu0 %v1285
        %v1287 = vpop.f32.mrf.mxu0
        %v1288 = vadd.f32 0.0, %v1287
        %v1289 = vpop.f32.mrf.mxu0
        %1290 = vmatprep.mubr.f32.mxu0 0.0
        %v1291 = vand.u32 %v336, 4294901760
        %v1292 = vsub.f32 %v336, %v1291
        %v1293 = vand.u32 %v1292, 4294901760
        %v1294 = vsub.f32 %v1292, %v1293
        %v1295 = vand.u32 %v1294, 4294901760
        %1296 = vmatmul.mubr.f32.gmra.mxu0 %v1295
        %v1297 = vpop.f32.mrf.mxu0
        %v1298 = vadd.f32 0.0, %v1297
        %v1299 = vpop.f32.mrf.mxu0
        %1300 = vmatprep.mubr.f32.mxu0 0.0
        %v1301 = vand.u32 %v339, 4294901760
        %v1302 = vsub.f32 %v339, %v1301
        %v1303 = vand.u32 %v1302, 4294901760
        %v1304 = vsub.f32 %v1302, %v1303
        %v1305 = vand.u32 %v1304, 4294901760
        %1306 = vmatmul.mubr.f32.gmra.mxu0 %v1305
        %v1307 = vpop.f32.mrf.mxu0
        %v1308 = vadd.f32 0.0, %v1307
        %v1309 = vpop.f32.mrf.mxu0
        %1310 = vmatprep.mubr.f32.mxu0 0.0
        %v1311 = vand.u32 %v342, 4294901760
        %v1312 = vsub.f32 %v342, %v1311
        %v1313 = vand.u32 %v1312, 4294901760
        %v1314 = vsub.f32 %v1312, %v1313
        %v1315 = vand.u32 %v1314, 4294901760
        %1316 = vmatmul.mubr.f32.gmra.mxu0 %v1315
        %v1317 = vpop.f32.mrf.mxu0
        %v1318 = vadd.f32 0.0, %v1317
        %v1319 = vpop.f32.mrf.mxu0
        %1320 = vmatprep.mubr.f32.mxu0 0.0
        %v1321 = vand.u32 %v345, 4294901760
        %v1322 = vsub.f32 %v345, %v1321
        %v1323 = vand.u32 %v1322, 4294901760
        %v1324 = vsub.f32 %v1322, %v1323
        %v1325 = vand.u32 %v1324, 4294901760
        %1326 = vmatmul.mubr.f32.gmra.mxu0 %v1325
        %v1327 = vpop.f32.mrf.mxu0
        %v1328 = vadd.f32 0.0, %v1327
        %v1329 = vpop.f32.mrf.mxu0
        %1330 = vmatprep.mubr.f32.mxu0 0.0
        %v1331 = vand.u32 %v348, 4294901760
        %v1332 = vsub.f32 %v348, %v1331
        %v1333 = vand.u32 %v1332, 4294901760
        %v1334 = vsub.f32 %v1332, %v1333
        %v1335 = vand.u32 %v1334, 4294901760
        %1336 = vmatmul.mubr.f32.gmra.mxu0 %v1335
        %v1337 = vpop.f32.mrf.mxu0
        %v1338 = vadd.f32 0.0, %v1337
        %v1339 = vpop.f32.mrf.mxu0
        %1340 = vdwg.mxu0
        %1341 = vmatprep.subr.mxu0 0.0
        %1342 = vmatpush1.msra.mxu0 0.0
        %1343 = vmatprep.subr.mxu0 0.0
        %1344 = vmatpush1.msra.mxu0 0.0
        %1345 = vmatprep.subr.mxu0 0.0
        %1346 = vmatpush1.msra.mxu0 0.0
        %1347 = vmatprep.subr.mxu0 0.0
        %1348 = vmatpush1.msra.mxu0 0.0
        %1349 = vmatprep.subr.mxu0 0.0
        %1350 = vmatpush1.msra.mxu0 0.0
        %1351 = vmatprep.subr.mxu0 0.0
        %1352 = vmatpush1.msra.mxu0 0.0
        %1353 = vmatprep.subr.mxu0 0.0
        %1354 = vmatpush1.msra.mxu0 0.0
        %1355 = vmatprep.subr.mxu0 0.0
        %1356 = vmatpush1.msra.mxu0 0.0
        %1357 = vmatprep.subr.mxu0 0.0
        %v1358 = vand.u32 %v316, 4294901760
        %v1359 = vsub.f32 %v316, %v1358
        %v1360 = vand.u32 %v1359, 4294901760
        %v1361 = vsub.f32 %v1359, %v1360
        %v1362 = vand.u32 %v1361, 4294901760
        %1363 = vmatpush1.msra.mxu0 %v1362
        %1364 = vmatprep.subr.mxu0 0.0
        %v1365 = vand.u32 %v313, 4294901760
        %v1366 = vsub.f32 %v313, %v1365
        %v1367 = vand.u32 %v1366, 4294901760
        %v1368 = vsub.f32 %v1366, %v1367
        %v1369 = vand.u32 %v1368, 4294901760
        %1370 = vmatpush1.msra.mxu0 %v1369
        %1371 = vmatprep.subr.mxu0 0.0
        %v1372 = vand.u32 %v310, 4294901760
        %v1373 = vsub.f32 %v310, %v1372
        %v1374 = vand.u32 %v1373, 4294901760
        %v1375 = vsub.f32 %v1373, %v1374
        %v1376 = vand.u32 %v1375, 4294901760
        %1377 = vmatpush1.msra.mxu0 %v1376
        %1378 = vmatprep.subr.mxu0 0.0
        %v1379 = vand.u32 %v307, 4294901760
        %v1380 = vsub.f32 %v307, %v1379
        %v1381 = vand.u32 %v1380, 4294901760
        %v1382 = vsub.f32 %v1380, %v1381
        %v1383 = vand.u32 %v1382, 4294901760
        %1384 = vmatpush1.msra.mxu0 %v1383
        %1385 = vmatprep.subr.mxu0 0.0
        %v1386 = vand.u32 %v304, 4294901760
        %v1387 = vsub.f32 %v304, %v1386
        %v1388 = vand.u32 %v1387, 4294901760
        %v1389 = vsub.f32 %v1387, %v1388
        %v1390 = vand.u32 %v1389, 4294901760
        %1391 = vmatpush1.msra.mxu0 %v1390
        %1392 = vmatprep.subr.mxu0 0.0
        %v1393 = vand.u32 %v301, 4294901760
        %v1394 = vsub.f32 %v301, %v1393
        %v1395 = vand.u32 %v1394, 4294901760
        %v1396 = vsub.f32 %v1394, %v1395
        %v1397 = vand.u32 %v1396, 4294901760
        %1398 = vmatpush1.msra.mxu0 %v1397
        %1399 = vmatprep.subr.mxu0 0.0
        %v1400 = vand.u32 %v298, 4294901760
        %v1401 = vsub.f32 %v298, %v1400
        %v1402 = vand.u32 %v1401, 4294901760
        %v1403 = vsub.f32 %v1401, %v1402
        %v1404 = vand.u32 %v1403, 4294901760
        %1405 = vmatpush1.msra.mxu0 %v1404
        %1406 = vmatprep.subr.mxu0 0.0
        %v1407 = vand.u32 %v295, 4294901760
        %v1408 = vsub.f32 %v295, %v1407
        %v1409 = vand.u32 %v1408, 4294901760
        %v1410 = vsub.f32 %v1408, %v1409
        %v1411 = vand.u32 %v1410, 4294901760
        %1412 = vmatpush1.msra.mxu0 %v1411
        %1413 = vmatprep.subr.mxu0 0.0
        %1414 = vmatpush2.msra.mxu0 0.0
        %1415 = vmatprep.subr.mxu0 0.0
        %1416 = vmatpush2.msra.mxu0 0.0
        %1417 = vmatprep.subr.mxu0 0.0
        %1418 = vmatpush2.msra.mxu0 0.0
        %1419 = vmatprep.subr.mxu0 0.0
        %1420 = vmatpush2.msra.mxu0 0.0
        %1421 = vmatprep.subr.mxu0 0.0
        %1422 = vmatpush2.msra.mxu0 0.0
        %1423 = vmatprep.subr.mxu0 0.0
        %1424 = vmatpush2.msra.mxu0 0.0
        %1425 = vmatprep.subr.mxu0 0.0
        %1426 = vmatpush2.msra.mxu0 0.0
        %1427 = vmatprep.subr.mxu0 0.0
        %1428 = vmatpush2.msra.mxu0 0.0
        %1429 = vmatprep.subr.mxu0 0.0
        %1430 = vmatpush2.msra.mxu0 0.0
        %1431 = vmatprep.subr.mxu0 0.0
        %1432 = vmatpush2.msra.mxu0 0.0
        %1433 = vmatprep.subr.mxu0 0.0
        %1434 = vmatpush2.msra.mxu0 0.0
        %1435 = vmatprep.subr.mxu0 0.0
        %1436 = vmatpush2.msra.mxu0 0.0
        %1437 = vmatprep.subr.mxu0 0.0
        %1438 = vmatpush2.msra.mxu0 0.0
        %1439 = vmatprep.subr.mxu0 0.0
        %1440 = vmatpush2.msra.mxu0 0.0
        %1441 = vmatprep.subr.mxu0 0.0
        %1442 = vmatpush2.msra.mxu0 0.0
        %1443 = vmatprep.subr.mxu0 0.0
        %1444 = vmatpush2.msra.mxu0 0.0
        %1445 = vmatprep.mubr.f32.mxu0 0.0
        %v1446 = vand.u32 %v327, 4294901760
        %1447 = vmatmul.mubr.f32.gmra.mxu0 %v1446
        %v1448 = vpop.f32.mrf.mxu0
        %v1449 = vadd.f32 %v1268, %v1448
        %v1450 = vpop.f32.mrf.mxu0
        %1451 = vmatprep.mubr.f32.mxu0 0.0
        %v1452 = vand.u32 %v330, 4294901760
        %1453 = vmatmul.mubr.f32.gmra.mxu0 %v1452
        %v1454 = vpop.f32.mrf.mxu0
        %v1455 = vadd.f32 %v1278, %v1454
        %v1456 = vpop.f32.mrf.mxu0
        %1457 = vmatprep.mubr.f32.mxu0 0.0
        %v1458 = vand.u32 %v333, 4294901760
        %1459 = vmatmul.mubr.f32.gmra.mxu0 %v1458
        %v1460 = vpop.f32.mrf.mxu0
        %v1461 = vadd.f32 %v1288, %v1460
        %v1462 = vpop.f32.mrf.mxu0
        %1463 = vmatprep.mubr.f32.mxu0 0.0
        %v1464 = vand.u32 %v336, 4294901760
        %1465 = vmatmul.mubr.f32.gmra.mxu0 %v1464
        %v1466 = vpop.f32.mrf.mxu0
        %v1467 = vadd.f32 %v1298, %v1466
        %v1468 = vpop.f32.mrf.mxu0
        %1469 = vmatprep.mubr.f32.mxu0 0.0
        %v1470 = vand.u32 %v339, 4294901760
        %1471 = vmatmul.mubr.f32.gmra.mxu0 %v1470
        %v1472 = vpop.f32.mrf.mxu0
        %v1473 = vadd.f32 %v1308, %v1472
        %v1474 = vpop.f32.mrf.mxu0
        %1475 = vmatprep.mubr.f32.mxu0 0.0
        %v1476 = vand.u32 %v342, 4294901760
        %1477 = vmatmul.mubr.f32.gmra.mxu0 %v1476
        %v1478 = vpop.f32.mrf.mxu0
        %v1479 = vadd.f32 %v1318, %v1478
        %v1480 = vpop.f32.mrf.mxu0
        %1481 = vmatprep.mubr.f32.mxu0 0.0
        %v1482 = vand.u32 %v345, 4294901760
        %1483 = vmatmul.mubr.f32.gmra.mxu0 %v1482
        %v1484 = vpop.f32.mrf.mxu0
        %v1485 = vadd.f32 %v1328, %v1484
        %v1486 = vpop.f32.mrf.mxu0
        %1487 = vmatprep.mubr.f32.mxu0 0.0
        %v1488 = vand.u32 %v348, 4294901760
        %1489 = vmatmul.mubr.f32.gmra.mxu0 %v1488
        %v1490 = vpop.f32.mrf.mxu0
        %v1491 = vadd.f32 %v1338, %v1490
        %v1492 = vpop.f32.mrf.mxu0
        %1493 = vdwg.mxu0
        %1494 = vmatprep.subr.mxu0 0.0
        %1495 = vmatpush1.msra.mxu0 0.0
        %1496 = vmatprep.subr.mxu0 0.0
        %1497 = vmatpush1.msra.mxu0 0.0
        %1498 = vmatprep.subr.mxu0 0.0
        %1499 = vmatpush1.msra.mxu0 0.0
        %1500 = vmatprep.subr.mxu0 0.0
        %1501 = vmatpush1.msra.mxu0 0.0
        %1502 = vmatprep.subr.mxu0 0.0
        %1503 = vmatpush1.msra.mxu0 0.0
        %1504 = vmatprep.subr.mxu0 0.0
        %1505 = vmatpush1.msra.mxu0 0.0
        %1506 = vmatprep.subr.mxu0 0.0
        %1507 = vmatpush1.msra.mxu0 0.0
        %1508 = vmatprep.subr.mxu0 0.0
        %1509 = vmatpush1.msra.mxu0 0.0
        %1510 = vmatprep.subr.mxu0 0.0
        %v1511 = vand.u32 %v316, 4294901760
        %v1512 = vsub.f32 %v316, %v1511
        %1513 = vmatpush1.msra.mxu0 %v1512
        %1514 = vmatprep.subr.mxu0 0.0
        %v1515 = vand.u32 %v313, 4294901760
        %v1516 = vsub.f32 %v313, %v1515
        %1517 = vmatpush1.msra.mxu0 %v1516
        %1518 = vmatprep.subr.mxu0 0.0
        %v1519 = vand.u32 %v310, 4294901760
        %v1520 = vsub.f32 %v310, %v1519
        %1521 = vmatpush1.msra.mxu0 %v1520
        %1522 = vmatprep.subr.mxu0 0.0
        %v1523 = vand.u32 %v307, 4294901760
        %v1524 = vsub.f32 %v307, %v1523
        %1525 = vmatpush1.msra.mxu0 %v1524
        %1526 = vmatprep.subr.mxu0 0.0
        %v1527 = vand.u32 %v304, 4294901760
        %v1528 = vsub.f32 %v304, %v1527
        %1529 = vmatpush1.msra.mxu0 %v1528
        %1530 = vmatprep.subr.mxu0 0.0
        %v1531 = vand.u32 %v301, 4294901760
        %v1532 = vsub.f32 %v301, %v1531
        %1533 = vmatpush1.msra.mxu0 %v1532
        %1534 = vmatprep.subr.mxu0 0.0
        %v1535 = vand.u32 %v298, 4294901760
        %v1536 = vsub.f32 %v298, %v1535
        %1537 = vmatpush1.msra.mxu0 %v1536
        %1538 = vmatprep.subr.mxu0 0.0
        %v1539 = vand.u32 %v295, 4294901760
        %v1540 = vsub.f32 %v295, %v1539
        %1541 = vmatpush1.msra.mxu0 %v1540
        %1542 = vmatprep.subr.mxu0 0.0
        %1543 = vmatpush2.msra.mxu0 0.0
        %1544 = vmatprep.subr.mxu0 0.0
        %1545 = vmatpush2.msra.mxu0 0.0
        %1546 = vmatprep.subr.mxu0 0.0
        %1547 = vmatpush2.msra.mxu0 0.0
        %1548 = vmatprep.subr.mxu0 0.0
        %1549 = vmatpush2.msra.mxu0 0.0
        %1550 = vmatprep.subr.mxu0 0.0
        %1551 = vmatpush2.msra.mxu0 0.0
        %1552 = vmatprep.subr.mxu0 0.0
        %1553 = vmatpush2.msra.mxu0 0.0
        %1554 = vmatprep.subr.mxu0 0.0
        %1555 = vmatpush2.msra.mxu0 0.0
        %1556 = vmatprep.subr.mxu0 0.0
        %1557 = vmatpush2.msra.mxu0 0.0
        %1558 = vmatprep.subr.mxu0 0.0
        %1559 = vmatpush2.msra.mxu0 0.0
        %1560 = vmatprep.subr.mxu0 0.0
        %1561 = vmatpush2.msra.mxu0 0.0
        %1562 = vmatprep.subr.mxu0 0.0
        %1563 = vmatpush2.msra.mxu0 0.0
        %1564 = vmatprep.subr.mxu0 0.0
        %1565 = vmatpush2.msra.mxu0 0.0
        %1566 = vmatprep.subr.mxu0 0.0
        %1567 = vmatpush2.msra.mxu0 0.0
        %1568 = vmatprep.subr.mxu0 0.0
        %1569 = vmatpush2.msra.mxu0 0.0
        %1570 = vmatprep.subr.mxu0 0.0
        %1571 = vmatpush2.msra.mxu0 0.0
        %1572 = vmatprep.subr.mxu0 0.0
        %1573 = vmatpush2.msra.mxu0 0.0
        %1574 = vmatprep.mubr.f32.mxu0 0.0
        %v1575 = vand.u32 %v327, 4294901760
        %v1576 = vsub.f32 %v327, %v1575
        %1577 = vmatmul.mubr.f32.gmra.mxu0 %v1576
        %v1578 = vpop.f32.mrf.mxu0
        %v1579 = vadd.f32 %v1449, %v1578
        %v1580 = vpop.f32.mrf.mxu0
        %1581 = vmatprep.mubr.f32.mxu0 0.0
        %v1582 = vand.u32 %v330, 4294901760
        %v1583 = vsub.f32 %v330, %v1582
        %1584 = vmatmul.mubr.f32.gmra.mxu0 %v1583
        %v1585 = vpop.f32.mrf.mxu0
        %v1586 = vadd.f32 %v1455, %v1585
        %v1587 = vpop.f32.mrf.mxu0
        %1588 = vmatprep.mubr.f32.mxu0 0.0
        %v1589 = vand.u32 %v333, 4294901760
        %v1590 = vsub.f32 %v333, %v1589
        %1591 = vmatmul.mubr.f32.gmra.mxu0 %v1590
        %v1592 = vpop.f32.mrf.mxu0
        %v1593 = vadd.f32 %v1461, %v1592
        %v1594 = vpop.f32.mrf.mxu0
        %1595 = vmatprep.mubr.f32.mxu0 0.0
        %v1596 = vand.u32 %v336, 4294901760
        %v1597 = vsub.f32 %v336, %v1596
        %1598 = vmatmul.mubr.f32.gmra.mxu0 %v1597
        %v1599 = vpop.f32.mrf.mxu0
        %v1600 = vadd.f32 %v1467, %v1599
        %v1601 = vpop.f32.mrf.mxu0
        %1602 = vmatprep.mubr.f32.mxu0 0.0
        %v1603 = vand.u32 %v339, 4294901760
        %v1604 = vsub.f32 %v339, %v1603
        %1605 = vmatmul.mubr.f32.gmra.mxu0 %v1604
        %v1606 = vpop.f32.mrf.mxu0
        %v1607 = vadd.f32 %v1473, %v1606
        %v1608 = vpop.f32.mrf.mxu0
        %1609 = vmatprep.mubr.f32.mxu0 0.0
        %v1610 = vand.u32 %v342, 4294901760
        %v1611 = vsub.f32 %v342, %v1610
        %1612 = vmatmul.mubr.f32.gmra.mxu0 %v1611
        %v1613 = vpop.f32.mrf.mxu0
        %v1614 = vadd.f32 %v1479, %v1613
        %v1615 = vpop.f32.mrf.mxu0
        %1616 = vmatprep.mubr.f32.mxu0 0.0
        %v1617 = vand.u32 %v345, 4294901760
        %v1618 = vsub.f32 %v345, %v1617
        %1619 = vmatmul.mubr.f32.gmra.mxu0 %v1618
        %v1620 = vpop.f32.mrf.mxu0
        %v1621 = vadd.f32 %v1485, %v1620
        %v1622 = vpop.f32.mrf.mxu0
        %1623 = vmatprep.mubr.f32.mxu0 0.0
        %v1624 = vand.u32 %v348, 4294901760
        %v1625 = vsub.f32 %v348, %v1624
        %1626 = vmatmul.mubr.f32.gmra.mxu0 %v1625
        %v1627 = vpop.f32.mrf.mxu0
        %v1628 = vadd.f32 %v1491, %v1627
        %v1629 = vpop.f32.mrf.mxu0
        %1630 = vdwg.mxu0
        %1631 = vmatprep.subr.mxu0 0.0
        %1632 = vmatpush1.msra.mxu0 0.0
        %1633 = vmatprep.subr.mxu0 0.0
        %1634 = vmatpush1.msra.mxu0 0.0
        %1635 = vmatprep.subr.mxu0 0.0
        %1636 = vmatpush1.msra.mxu0 0.0
        %1637 = vmatprep.subr.mxu0 0.0
        %1638 = vmatpush1.msra.mxu0 0.0
        %1639 = vmatprep.subr.mxu0 0.0
        %1640 = vmatpush1.msra.mxu0 0.0
        %1641 = vmatprep.subr.mxu0 0.0
        %1642 = vmatpush1.msra.mxu0 0.0
        %1643 = vmatprep.subr.mxu0 0.0
        %1644 = vmatpush1.msra.mxu0 0.0
        %1645 = vmatprep.subr.mxu0 0.0
        %1646 = vmatpush1.msra.mxu0 0.0
        %1647 = vmatprep.subr.mxu0 0.0
        %v1648 = vand.u32 %v316, 4294901760
        %1649 = vmatpush1.msra.mxu0 %v1648
        %1650 = vmatprep.subr.mxu0 0.0
        %v1651 = vand.u32 %v313, 4294901760
        %1652 = vmatpush1.msra.mxu0 %v1651
        %1653 = vmatprep.subr.mxu0 0.0
        %v1654 = vand.u32 %v310, 4294901760
        %1655 = vmatpush1.msra.mxu0 %v1654
        %1656 = vmatprep.subr.mxu0 0.0
        %v1657 = vand.u32 %v307, 4294901760
        %1658 = vmatpush1.msra.mxu0 %v1657
        %1659 = vmatprep.subr.mxu0 0.0
        %v1660 = vand.u32 %v304, 4294901760
        %1661 = vmatpush1.msra.mxu0 %v1660
        %1662 = vmatprep.subr.mxu0 0.0
        %v1663 = vand.u32 %v301, 4294901760
        %1664 = vmatpush1.msra.mxu0 %v1663
        %1665 = vmatprep.subr.mxu0 0.0
        %v1666 = vand.u32 %v298, 4294901760
        %1667 = vmatpush1.msra.mxu0 %v1666
        %1668 = vmatprep.subr.mxu0 0.0
        %v1669 = vand.u32 %v295, 4294901760
        %1670 = vmatpush1.msra.mxu0 %v1669
        %1671 = vmatprep.subr.mxu0 0.0
        %1672 = vmatpush2.msra.mxu0 0.0
        %1673 = vmatprep.subr.mxu0 0.0
        %1674 = vmatpush2.msra.mxu0 0.0
        %1675 = vmatprep.subr.mxu0 0.0
        %1676 = vmatpush2.msra.mxu0 0.0
        %1677 = vmatprep.subr.mxu0 0.0
        %1678 = vmatpush2.msra.mxu0 0.0
        %1679 = vmatprep.subr.mxu0 0.0
        %1680 = vmatpush2.msra.mxu0 0.0
        %1681 = vmatprep.subr.mxu0 0.0
        %1682 = vmatpush2.msra.mxu0 0.0
        %1683 = vmatprep.subr.mxu0 0.0
        %1684 = vmatpush2.msra.mxu0 0.0
        %1685 = vmatprep.subr.mxu0 0.0
        %1686 = vmatpush2.msra.mxu0 0.0
        %1687 = vmatprep.subr.mxu0 0.0
        %1688 = vmatpush2.msra.mxu0 0.0
        %1689 = vmatprep.subr.mxu0 0.0
        %1690 = vmatpush2.msra.mxu0 0.0
        %1691 = vmatprep.subr.mxu0 0.0
        %1692 = vmatpush2.msra.mxu0 0.0
        %1693 = vmatprep.subr.mxu0 0.0
        %1694 = vmatpush2.msra.mxu0 0.0
        %1695 = vmatprep.subr.mxu0 0.0
        %1696 = vmatpush2.msra.mxu0 0.0
        %1697 = vmatprep.subr.mxu0 0.0
        %1698 = vmatpush2.msra.mxu0 0.0
        %1699 = vmatprep.subr.mxu0 0.0
        %1700 = vmatpush2.msra.mxu0 0.0
        %1701 = vmatprep.subr.mxu0 0.0
        %1702 = vmatpush2.msra.mxu0 0.0
        %1703 = vmatprep.mubr.f32.mxu0 0.0
        %v1704 = vand.u32 %v327, 4294901760
        %v1705 = vsub.f32 %v327, %v1704
        %v1706 = vand.u32 %v1705, 4294901760
        %1707 = vmatmul.mubr.f32.gmra.mxu0 %v1706
        %v1708 = vpop.f32.mrf.mxu0
        %v1709 = vadd.f32 %v1579, %v1708
        %v1710 = vpop.f32.mrf.mxu0
        %1711 = vmatprep.mubr.f32.mxu0 0.0
        %v1712 = vand.u32 %v330, 4294901760
        %v1713 = vsub.f32 %v330, %v1712
        %v1714 = vand.u32 %v1713, 4294901760
        %1715 = vmatmul.mubr.f32.gmra.mxu0 %v1714
        %v1716 = vpop.f32.mrf.mxu0
        %v1717 = vadd.f32 %v1586, %v1716
        %v1718 = vpop.f32.mrf.mxu0
        %1719 = vmatprep.mubr.f32.mxu0 0.0
        %v1720 = vand.u32 %v333, 4294901760
        %v1721 = vsub.f32 %v333, %v1720
        %v1722 = vand.u32 %v1721, 4294901760
        %1723 = vmatmul.mubr.f32.gmra.mxu0 %v1722
        %v1724 = vpop.f32.mrf.mxu0
        %v1725 = vadd.f32 %v1593, %v1724
        %v1726 = vpop.f32.mrf.mxu0
        %1727 = vmatprep.mubr.f32.mxu0 0.0
        %v1728 = vand.u32 %v336, 4294901760
        %v1729 = vsub.f32 %v336, %v1728
        %v1730 = vand.u32 %v1729, 4294901760
        %1731 = vmatmul.mubr.f32.gmra.mxu0 %v1730
        %v1732 = vpop.f32.mrf.mxu0
        %v1733 = vadd.f32 %v1600, %v1732
        %v1734 = vpop.f32.mrf.mxu0
        %1735 = vmatprep.mubr.f32.mxu0 0.0
        %v1736 = vand.u32 %v339, 4294901760
        %v1737 = vsub.f32 %v339, %v1736
        %v1738 = vand.u32 %v1737, 4294901760
        %1739 = vmatmul.mubr.f32.gmra.mxu0 %v1738
        %v1740 = vpop.f32.mrf.mxu0
        %v1741 = vadd.f32 %v1607, %v1740
        %v1742 = vpop.f32.mrf.mxu0
        %1743 = vmatprep.mubr.f32.mxu0 0.0
        %v1744 = vand.u32 %v342, 4294901760
        %v1745 = vsub.f32 %v342, %v1744
        %v1746 = vand.u32 %v1745, 4294901760
        %1747 = vmatmul.mubr.f32.gmra.mxu0 %v1746
        %v1748 = vpop.f32.mrf.mxu0
        %v1749 = vadd.f32 %v1614, %v1748
        %v1750 = vpop.f32.mrf.mxu0
        %1751 = vmatprep.mubr.f32.mxu0 0.0
        %v1752 = vand.u32 %v345, 4294901760
        %v1753 = vsub.f32 %v345, %v1752
        %v1754 = vand.u32 %v1753, 4294901760
        %1755 = vmatmul.mubr.f32.gmra.mxu0 %v1754
        %v1756 = vpop.f32.mrf.mxu0
        %v1757 = vadd.f32 %v1621, %v1756
        %v1758 = vpop.f32.mrf.mxu0
        %1759 = vmatprep.mubr.f32.mxu0 0.0
        %v1760 = vand.u32 %v348, 4294901760
        %v1761 = vsub.f32 %v348, %v1760
        %v1762 = vand.u32 %v1761, 4294901760
        %1763 = vmatmul.mubr.f32.gmra.mxu0 %v1762
        %v1764 = vpop.f32.mrf.mxu0
        %v1765 = vadd.f32 %v1628, %v1764
        %v1766 = vpop.f32.mrf.mxu0
        %1767 = vdwg.mxu0
        %1768 = vmatprep.subr.mxu0 0.0
        %1769 = vmatpush1.msra.mxu0 0.0
        %1770 = vmatprep.subr.mxu0 0.0
        %1771 = vmatpush1.msra.mxu0 0.0
        %1772 = vmatprep.subr.mxu0 0.0
        %1773 = vmatpush1.msra.mxu0 0.0
        %1774 = vmatprep.subr.mxu0 0.0
        %1775 = vmatpush1.msra.mxu0 0.0
        %1776 = vmatprep.subr.mxu0 0.0
        %1777 = vmatpush1.msra.mxu0 0.0
        %1778 = vmatprep.subr.mxu0 0.0
        %1779 = vmatpush1.msra.mxu0 0.0
        %1780 = vmatprep.subr.mxu0 0.0
        %1781 = vmatpush1.msra.mxu0 0.0
        %1782 = vmatprep.subr.mxu0 0.0
        %1783 = vmatpush1.msra.mxu0 0.0
        %1784 = vmatprep.subr.mxu0 0.0
        %v1785 = vand.u32 %v316, 4294901760
        %v1786 = vsub.f32 %v316, %v1785
        %v1787 = vand.u32 %v1786, 4294901760
        %1788 = vmatpush1.msra.mxu0 %v1787
        %1789 = vmatprep.subr.mxu0 0.0
        %v1790 = vand.u32 %v313, 4294901760
        %v1791 = vsub.f32 %v313, %v1790
        %v1792 = vand.u32 %v1791, 4294901760
        %1793 = vmatpush1.msra.mxu0 %v1792
        %1794 = vmatprep.subr.mxu0 0.0
        %v1795 = vand.u32 %v310, 4294901760
        %v1796 = vsub.f32 %v310, %v1795
        %v1797 = vand.u32 %v1796, 4294901760
        %1798 = vmatpush1.msra.mxu0 %v1797
        %1799 = vmatprep.subr.mxu0 0.0
        %v1800 = vand.u32 %v307, 4294901760
        %v1801 = vsub.f32 %v307, %v1800
        %v1802 = vand.u32 %v1801, 4294901760
        %1803 = vmatpush1.msra.mxu0 %v1802
        %1804 = vmatprep.subr.mxu0 0.0
        %v1805 = vand.u32 %v304, 4294901760
        %v1806 = vsub.f32 %v304, %v1805
        %v1807 = vand.u32 %v1806, 4294901760
        %1808 = vmatpush1.msra.mxu0 %v1807
        %1809 = vmatprep.subr.mxu0 0.0
        %v1810 = vand.u32 %v301, 4294901760
        %v1811 = vsub.f32 %v301, %v1810
        %v1812 = vand.u32 %v1811, 4294901760
        %1813 = vmatpush1.msra.mxu0 %v1812
        %1814 = vmatprep.subr.mxu0 0.0
        %v1815 = vand.u32 %v298, 4294901760
        %v1816 = vsub.f32 %v298, %v1815
        %v1817 = vand.u32 %v1816, 4294901760
        %1818 = vmatpush1.msra.mxu0 %v1817
        %1819 = vmatprep.subr.mxu0 0.0
        %v1820 = vand.u32 %v295, 4294901760
        %v1821 = vsub.f32 %v295, %v1820
        %v1822 = vand.u32 %v1821, 4294901760
        %1823 = vmatpush1.msra.mxu0 %v1822
        %1824 = vmatprep.subr.mxu0 0.0
        %1825 = vmatpush2.msra.mxu0 0.0
        %1826 = vmatprep.subr.mxu0 0.0
        %1827 = vmatpush2.msra.mxu0 0.0
        %1828 = vmatprep.subr.mxu0 0.0
        %1829 = vmatpush2.msra.mxu0 0.0
        %1830 = vmatprep.subr.mxu0 0.0
        %1831 = vmatpush2.msra.mxu0 0.0
        %1832 = vmatprep.subr.mxu0 0.0
        %1833 = vmatpush2.msra.mxu0 0.0
        %1834 = vmatprep.subr.mxu0 0.0
        %1835 = vmatpush2.msra.mxu0 0.0
        %1836 = vmatprep.subr.mxu0 0.0
        %1837 = vmatpush2.msra.mxu0 0.0
        %1838 = vmatprep.subr.mxu0 0.0
        %1839 = vmatpush2.msra.mxu0 0.0
        %1840 = vmatprep.subr.mxu0 0.0
        %1841 = vmatpush2.msra.mxu0 0.0
        %1842 = vmatprep.subr.mxu0 0.0
        %1843 = vmatpush2.msra.mxu0 0.0
        %1844 = vmatprep.subr.mxu0 0.0
        %1845 = vmatpush2.msra.mxu0 0.0
        %1846 = vmatprep.subr.mxu0 0.0
        %1847 = vmatpush2.msra.mxu0 0.0
        %1848 = vmatprep.subr.mxu0 0.0
        %1849 = vmatpush2.msra.mxu0 0.0
        %1850 = vmatprep.subr.mxu0 0.0
        %1851 = vmatpush2.msra.mxu0 0.0
        %1852 = vmatprep.subr.mxu0 0.0
        %1853 = vmatpush2.msra.mxu0 0.0
        %1854 = vmatprep.subr.mxu0 0.0
        %1855 = vmatpush2.msra.mxu0 0.0
        %1856 = vmatprep.mubr.f32.mxu0 0.0
        %v1857 = vand.u32 %v327, 4294901760
        %1858 = vmatmul.mubr.f32.gmra.mxu0 %v1857
        %v1859 = vpop.f32.mrf.mxu0
        %v1860 = vadd.f32 %v1709, %v1859
        %v1861 = vpop.f32.mrf.mxu0
        %1862 = vmatprep.mubr.f32.mxu0 0.0
        %v1863 = vand.u32 %v330, 4294901760
        %1864 = vmatmul.mubr.f32.gmra.mxu0 %v1863
        %v1865 = vpop.f32.mrf.mxu0
        %v1866 = vadd.f32 %v1717, %v1865
        %v1867 = vpop.f32.mrf.mxu0
        %1868 = vmatprep.mubr.f32.mxu0 0.0
        %v1869 = vand.u32 %v333, 4294901760
        %1870 = vmatmul.mubr.f32.gmra.mxu0 %v1869
        %v1871 = vpop.f32.mrf.mxu0
        %v1872 = vadd.f32 %v1725, %v1871
        %v1873 = vpop.f32.mrf.mxu0
        %1874 = vmatprep.mubr.f32.mxu0 0.0
        %v1875 = vand.u32 %v336, 4294901760
        %1876 = vmatmul.mubr.f32.gmra.mxu0 %v1875
        %v1877 = vpop.f32.mrf.mxu0
        %v1878 = vadd.f32 %v1733, %v1877
        %v1879 = vpop.f32.mrf.mxu0
        %1880 = vmatprep.mubr.f32.mxu0 0.0
        %v1881 = vand.u32 %v339, 4294901760
        %1882 = vmatmul.mubr.f32.gmra.mxu0 %v1881
        %v1883 = vpop.f32.mrf.mxu0
        %v1884 = vadd.f32 %v1741, %v1883
        %v1885 = vpop.f32.mrf.mxu0
        %1886 = vmatprep.mubr.f32.mxu0 0.0
        %v1887 = vand.u32 %v342, 4294901760
        %1888 = vmatmul.mubr.f32.gmra.mxu0 %v1887
        %v1889 = vpop.f32.mrf.mxu0
        %v1890 = vadd.f32 %v1749, %v1889
        %v1891 = vpop.f32.mrf.mxu0
        %1892 = vmatprep.mubr.f32.mxu0 0.0
        %v1893 = vand.u32 %v345, 4294901760
        %1894 = vmatmul.mubr.f32.gmra.mxu0 %v1893
        %v1895 = vpop.f32.mrf.mxu0
        %v1896 = vadd.f32 %v1757, %v1895
        %v1897 = vpop.f32.mrf.mxu0
        %1898 = vmatprep.mubr.f32.mxu0 0.0
        %v1899 = vand.u32 %v348, 4294901760
        %1900 = vmatmul.mubr.f32.gmra.mxu0 %v1899
        %v1901 = vpop.f32.mrf.mxu0
        %v1902 = vadd.f32 %v1765, %v1901
        %v1903 = vpop.f32.mrf.mxu0
        %1904 = vdwg.mxu0
        %1905 = vmatprep.subr.mxu0 0.0
        %1906 = vmatpush1.msra.mxu0 0.0
        %1907 = vmatprep.subr.mxu0 0.0
        %1908 = vmatpush1.msra.mxu0 0.0
        %1909 = vmatprep.subr.mxu0 0.0
        %1910 = vmatpush1.msra.mxu0 0.0
        %1911 = vmatprep.subr.mxu0 0.0
        %1912 = vmatpush1.msra.mxu0 0.0
        %1913 = vmatprep.subr.mxu0 0.0
        %1914 = vmatpush1.msra.mxu0 0.0
        %1915 = vmatprep.subr.mxu0 0.0
        %1916 = vmatpush1.msra.mxu0 0.0
        %1917 = vmatprep.subr.mxu0 0.0
        %1918 = vmatpush1.msra.mxu0 0.0
        %1919 = vmatprep.subr.mxu0 0.0
        %1920 = vmatpush1.msra.mxu0 0.0
        %1921 = vmatprep.subr.mxu0 0.0
        %v1922 = vand.u32 %v316, 4294901760
        %1923 = vmatpush1.msra.mxu0 %v1922
        %1924 = vmatprep.subr.mxu0 0.0
        %v1925 = vand.u32 %v313, 4294901760
        %1926 = vmatpush1.msra.mxu0 %v1925
        %1927 = vmatprep.subr.mxu0 0.0
        %v1928 = vand.u32 %v310, 4294901760
        %1929 = vmatpush1.msra.mxu0 %v1928
        %1930 = vmatprep.subr.mxu0 0.0
        %v1931 = vand.u32 %v307, 4294901760
        %1932 = vmatpush1.msra.mxu0 %v1931
        %1933 = vmatprep.subr.mxu0 0.0
        %v1934 = vand.u32 %v304, 4294901760
        %1935 = vmatpush1.msra.mxu0 %v1934
        %1936 = vmatprep.subr.mxu0 0.0
        %v1937 = vand.u32 %v301, 4294901760
        %1938 = vmatpush1.msra.mxu0 %v1937
        %1939 = vmatprep.subr.mxu0 0.0
        %v1940 = vand.u32 %v298, 4294901760
        %1941 = vmatpush1.msra.mxu0 %v1940
        %1942 = vmatprep.subr.mxu0 0.0
        %v1943 = vand.u32 %v295, 4294901760
        %1944 = vmatpush1.msra.mxu0 %v1943
        %1945 = vmatprep.subr.mxu0 0.0
        %1946 = vmatpush2.msra.mxu0 0.0
        %1947 = vmatprep.subr.mxu0 0.0
        %1948 = vmatpush2.msra.mxu0 0.0
        %1949 = vmatprep.subr.mxu0 0.0
        %1950 = vmatpush2.msra.mxu0 0.0
        %1951 = vmatprep.subr.mxu0 0.0
        %1952 = vmatpush2.msra.mxu0 0.0
        %1953 = vmatprep.subr.mxu0 0.0
        %1954 = vmatpush2.msra.mxu0 0.0
        %1955 = vmatprep.subr.mxu0 0.0
        %1956 = vmatpush2.msra.mxu0 0.0
        %1957 = vmatprep.subr.mxu0 0.0
        %1958 = vmatpush2.msra.mxu0 0.0
        %1959 = vmatprep.subr.mxu0 0.0
        %1960 = vmatpush2.msra.mxu0 0.0
        %1961 = vmatprep.subr.mxu0 0.0
        %1962 = vmatpush2.msra.mxu0 0.0
        %1963 = vmatprep.subr.mxu0 0.0
        %1964 = vmatpush2.msra.mxu0 0.0
        %1965 = vmatprep.subr.mxu0 0.0
        %1966 = vmatpush2.msra.mxu0 0.0
        %1967 = vmatprep.subr.mxu0 0.0
        %1968 = vmatpush2.msra.mxu0 0.0
        %1969 = vmatprep.subr.mxu0 0.0
        %1970 = vmatpush2.msra.mxu0 0.0
        %1971 = vmatprep.subr.mxu0 0.0
        %1972 = vmatpush2.msra.mxu0 0.0
        %1973 = vmatprep.subr.mxu0 0.0
        %1974 = vmatpush2.msra.mxu0 0.0
        %1975 = vmatprep.subr.mxu0 0.0
        %1976 = vmatpush2.msra.mxu0 0.0
        %1977 = vmatprep.mubr.f32.mxu0 0.0
        %v1978 = vand.u32 %v327, 4294901760
        %1979 = vmatmul.mubr.f32.gmra.mxu0 %v1978
        %v1980 = vpop.f32.mrf.mxu0
        %v1981 = vadd.f32 %v1860, %v1980
        %v1982 = vpop.f32.mrf.mxu0
        %1983 = vmatprep.mubr.f32.mxu0 0.0
        %v1984 = vand.u32 %v330, 4294901760
        %1985 = vmatmul.mubr.f32.gmra.mxu0 %v1984
        %v1986 = vpop.f32.mrf.mxu0
        %v1987 = vadd.f32 %v1866, %v1986
        %v1988 = vpop.f32.mrf.mxu0
        %1989 = vmatprep.mubr.f32.mxu0 0.0
        %v1990 = vand.u32 %v333, 4294901760
        %1991 = vmatmul.mubr.f32.gmra.mxu0 %v1990
        %v1992 = vpop.f32.mrf.mxu0
        %v1993 = vadd.f32 %v1872, %v1992
        %v1994 = vpop.f32.mrf.mxu0
        %1995 = vmatprep.mubr.f32.mxu0 0.0
        %v1996 = vand.u32 %v336, 4294901760
        %1997 = vmatmul.mubr.f32.gmra.mxu0 %v1996
        %v1998 = vpop.f32.mrf.mxu0
        %v1999 = vadd.f32 %v1878, %v1998
        %v2000 = vpop.f32.mrf.mxu0
        %2001 = vmatprep.mubr.f32.mxu0 0.0
        %v2002 = vand.u32 %v339, 4294901760
        %2003 = vmatmul.mubr.f32.gmra.mxu0 %v2002
        %v2004 = vpop.f32.mrf.mxu0
        %v2005 = vadd.f32 %v1884, %v2004
        %v2006 = vpop.f32.mrf.mxu0
        %2007 = vmatprep.mubr.f32.mxu0 0.0
        %v2008 = vand.u32 %v342, 4294901760
        %2009 = vmatmul.mubr.f32.gmra.mxu0 %v2008
        %v2010 = vpop.f32.mrf.mxu0
        %v2011 = vadd.f32 %v1890, %v2010
        %v2012 = vpop.f32.mrf.mxu0
        %2013 = vmatprep.mubr.f32.mxu0 0.0
        %v2014 = vand.u32 %v345, 4294901760
        %2015 = vmatmul.mubr.f32.gmra.mxu0 %v2014
        %v2016 = vpop.f32.mrf.mxu0
        %v2017 = vadd.f32 %v1896, %v2016
        %v2018 = vpop.f32.mrf.mxu0
        %2019 = vmatprep.mubr.f32.mxu0 0.0
        %v2020 = vand.u32 %v348, 4294901760
        %2021 = vmatmul.mubr.f32.gmra.mxu0 %v2020
        %v2022 = vpop.f32.mrf.mxu0
        %v2023 = vadd.f32 %v1902, %v2022
        %v2024 = vpop.f32.mrf.mxu0
        %2025 = vdwg.mxu0
        %v2026 = vmul.f32 %v1143, 0.001953125
        %v2027 = vmul.f32 %v1149, 0.001953125
        %v2028 = vmul.f32 %v1155, 0.001953125
        %v2029 = vmul.f32 %v1161, 0.001953125
        %v2030 = vmul.f32 %v1167, 0.001953125
        %v2031 = vmul.f32 %v1173, 0.001953125
        %v2032 = vmul.f32 %v1179, 0.001953125
        %v2033 = vmul.f32 %v1185, 0.001953125
        %v2034 = vmul.f32 %v1981, 0.001953125
        %v2035 = vmul.f32 %v1987, 0.001953125
        %v2036 = vmul.f32 %v1993, 0.001953125
        %v2037 = vmul.f32 %v1999, 0.001953125
        %v2038 = vmul.f32 %v2005, 0.001953125
        %v2039 = vmul.f32 %v2011, 0.001953125
        %v2040 = vmul.f32 %v2017, 0.001953125
        %v2041 = vmul.f32 %v2023, 0.001953125
        %v2042 = vmul.f32 %v2026, %v2026
        %v2043 = vmul.f32 %v2027, %v2027
        %v2044 = vmul.f32 %v2028, %v2028
        %v2045 = vmul.f32 %v2029, %v2029
        %v2046 = vmul.f32 %v2030, %v2030
        %v2047 = vmul.f32 %v2031, %v2031
        %v2048 = vmul.f32 %v2032, %v2032
        %v2049 = vmul.f32 %v2033, %v2033
        %v2050 = vsub.f32 %v2034, %v2042
        %v2051 = vsub.f32 %v2035, %v2043
        %v2052 = vsub.f32 %v2036, %v2044
        %v2053 = vsub.f32 %v2037, %v2045
        %v2054 = vsub.f32 %v2038, %v2046
        %v2055 = vsub.f32 %v2039, %v2047
        %v2056 = vsub.f32 %v2040, %v2048
        %v2057 = vsub.f32 %v2041, %v2049
        %v2058 = vmax.f32 %v2050, 0.0
        %v2059 = vmax.f32 %v2051, 0.0
        %v2060 = vmax.f32 %v2052, 0.0
        %v2061 = vmax.f32 %v2053, 0.0
        %v2062 = vmax.f32 %v2054, 0.0
        %v2063 = vmax.f32 %v2055, 0.0
        %v2064 = vmax.f32 %v2056, 0.0
        %v2065 = vmax.f32 %v2057, 0.0
        %v2066 = vadd.f32 %v2058, 1e-06
        %v2067 = vadd.f32 %v2059, 1e-06
        %v2068 = vadd.f32 %v2060, 1e-06
        %v2069 = vadd.f32 %v2061, 1e-06
        %v2070 = vadd.f32 %v2062, 1e-06
        %v2071 = vadd.f32 %v2063, 1e-06
        %v2072 = vadd.f32 %v2064, 1e-06
        %v2073 = vadd.f32 %v2065, 1e-06
        %v2074 = vrsqrt.pop %v2066
        %v2075 = vrsqrt.pop %v2067
        %v2076 = vrsqrt.pop %v2068
        %v2077 = vrsqrt.pop %v2069
        %v2078 = vrsqrt.pop %v2070
        %v2079 = vrsqrt.pop %v2071
        %v2080 = vrsqrt.pop %v2072
        %v2081 = vrsqrt.pop %v2073
        %s2082 = smul.u32 %s26, 64
        %s2083 = scalar_lea.vmem %s2, %s2082
        %v2084 = vld [vmem:[%s2083] sm:$0xff]
        %v2085 = vld [vmem:[%s2083 + $0x8] sm:$0xff]
        %v2086 = vld [vmem:[%s2083 + $0x10] sm:$0xff]
        %v2087 = vld [vmem:[%s2083 + $0x18] sm:$0xff]
        %v2088 = vld [vmem:[%s2083 + $0x20] sm:$0xff]
        %v2089 = vld [vmem:[%s2083 + $0x28] sm:$0xff]
        %v2090 = vld [vmem:[%s2083 + $0x30] sm:$0xff]
        %v2091 = vld [vmem:[%s2083 + $0x38] sm:$0xff]
        %s2092 = scalar_lea.vmem %s3, %s2082
        %v2093 = vld [vmem:[%s2092] sm:$0xff]
        %v2094 = vld [vmem:[%s2092 + $0x8] sm:$0xff]
        %v2095 = vld [vmem:[%s2092 + $0x10] sm:$0xff]
        %v2096 = vld [vmem:[%s2092 + $0x18] sm:$0xff]
        %v2097 = vld [vmem:[%s2092 + $0x20] sm:$0xff]
        %v2098 = vld [vmem:[%s2092 + $0x28] sm:$0xff]
        %v2099 = vld [vmem:[%s2092 + $0x30] sm:$0xff]
        %v2100 = vld [vmem:[%s2092 + $0x38] sm:$0xff]
        %v2101 = vmul.f32 %v2084, %v2074
        %v2102 = vmul.f32 %v2085, %v2075
        %v2103 = vmul.f32 %v2086, %v2076
        %v2104 = vmul.f32 %v2087, %v2077
        %v2105 = vmul.f32 %v2088, %v2078
        %v2106 = vmul.f32 %v2089, %v2079
        %v2107 = vmul.f32 %v2090, %v2080
        %v2108 = vmul.f32 %v2091, %v2081
        %v2109 = vmul.f32 %v2026, %v2101
        %v2110 = vmul.f32 %v2027, %v2102
        %v2111 = vmul.f32 %v2028, %v2103
        %v2112 = vmul.f32 %v2029, %v2104
        %v2113 = vmul.f32 %v2030, %v2105
        %v2114 = vmul.f32 %v2031, %v2106
        %v2115 = vmul.f32 %v2032, %v2107
        %v2116 = vmul.f32 %v2033, %v2108
        %v2117 = vsub.f32 %v2093, %v2109
        %v2118 = vsub.f32 %v2094, %v2110
        %v2119 = vsub.f32 %v2095, %v2111
        %v2120 = vsub.f32 %v2096, %v2112
        %v2121 = vsub.f32 %v2097, %v2113
        %v2122 = vsub.f32 %v2098, %v2114
        %v2123 = vsub.f32 %v2099, %v2115
        %v2124 = vsub.f32 %v2100, %v2116
        %2126 = vset.pattern.permute.xlu0 0
        %2127 = vperm.xlu0 %2126, %v2101
        %v2128 = vpop.permute.xlu0 %2127
        %2131 = vset.pattern.permute.xlu0 0
        %2132 = vperm.xlu0 %2131, %v2102
        %v2133 = vpop.permute.xlu0 %2132
        %2136 = vset.pattern.permute.xlu0 0
        %2137 = vperm.xlu0 %2136, %v2103
        %v2138 = vpop.permute.xlu0 %2137
        %2141 = vset.pattern.permute.xlu0 0
        %2142 = vperm.xlu0 %2141, %v2104
        %v2143 = vpop.permute.xlu0 %2142
        %2146 = vset.pattern.permute.xlu0 0
        %2147 = vperm.xlu0 %2146, %v2105
        %v2148 = vpop.permute.xlu0 %2147
        %2151 = vset.pattern.permute.xlu0 0
        %2152 = vperm.xlu0 %2151, %v2106
        %v2153 = vpop.permute.xlu0 %2152
        %2156 = vset.pattern.permute.xlu0 0
        %2157 = vperm.xlu0 %2156, %v2107
        %v2158 = vpop.permute.xlu0 %2157
        %2161 = vset.pattern.permute.xlu0 0
        %2162 = vperm.xlu0 %2161, %v2108
        %v2163 = vpop.permute.xlu0 %2162
        %v2165 = vmul.f32 %v237, %v2128
        %v2166 = vmul.f32 %v238, %v2128
        %v2167 = vmul.f32 %v239, %v2133
        %v2168 = vmul.f32 %v240, %v2133
        %v2169 = vmul.f32 %v241, %v2138
        %v2170 = vmul.f32 %v242, %v2138
        %v2171 = vmul.f32 %v243, %v2143
        %v2172 = vmul.f32 %v244, %v2143
        %v2173 = vmul.f32 %v245, %v2148
        %v2174 = vmul.f32 %v246, %v2148
        %v2175 = vmul.f32 %v247, %v2153
        %v2176 = vmul.f32 %v248, %v2153
        %v2177 = vmul.f32 %v249, %v2158
        %v2178 = vmul.f32 %v250, %v2158
        %v2179 = vmul.f32 %v251, %v2163
        %v2180 = vmul.f32 %v252, %v2163
        %2182 = vset.pattern.permute.xlu0 0
        %2183 = vperm.xlu0 %2182, %v2117
        %v2184 = vpop.permute.xlu0 %2183
        %2187 = vset.pattern.permute.xlu0 0
        %2188 = vperm.xlu0 %2187, %v2118
        %v2189 = vpop.permute.xlu0 %2188
        %2192 = vset.pattern.permute.xlu0 0
        %2193 = vperm.xlu0 %2192, %v2119
        %v2194 = vpop.permute.xlu0 %2193
        %2197 = vset.pattern.permute.xlu0 0
        %2198 = vperm.xlu0 %2197, %v2120
        %v2199 = vpop.permute.xlu0 %2198
        %2202 = vset.pattern.permute.xlu0 0
        %2203 = vperm.xlu0 %2202, %v2121
        %v2204 = vpop.permute.xlu0 %2203
        %2207 = vset.pattern.permute.xlu0 0
        %2208 = vperm.xlu0 %2207, %v2122
        %v2209 = vpop.permute.xlu0 %2208
        %2212 = vset.pattern.permute.xlu0 0
        %2213 = vperm.xlu0 %2212, %v2123
        %v2214 = vpop.permute.xlu0 %2213
        %2217 = vset.pattern.permute.xlu0 0
        %2218 = vperm.xlu0 %2217, %v2124
        %v2219 = vpop.permute.xlu0 %2218
        %v2221 = vadd.f32 %v2165, %v2184
        %v2222 = vadd.f32 %v2166, %v2184
        %v2223 = vadd.f32 %v2167, %v2189
        %v2224 = vadd.f32 %v2168, %v2189
        %v2225 = vadd.f32 %v2169, %v2194
        %v2226 = vadd.f32 %v2170, %v2194
        %v2227 = vadd.f32 %v2171, %v2199
        %v2228 = vadd.f32 %v2172, %v2199
        %v2229 = vadd.f32 %v2173, %v2204
        %v2230 = vadd.f32 %v2174, %v2204
        %v2231 = vadd.f32 %v2175, %v2209
        %v2232 = vadd.f32 %v2176, %v2209
        %v2233 = vadd.f32 %v2177, %v2214
        %v2234 = vadd.f32 %v2178, %v2214
        %v2235 = vadd.f32 %v2179, %v2219
        %v2236 = vadd.f32 %v2180, %v2219
        %2237 = vst [vmem:[%s234] sm:$0xff] %v2221
        %2238 = vst [vmem:[%s234 + $0x8] sm:$0xff] %v2222
        %2239 = vst [vmem:[%s234 + $0x10] sm:$0xff] %v2223
        %2240 = vst [vmem:[%s234 + $0x18] sm:$0xff] %v2224
        %2241 = vst [vmem:[%s234 + $0x20] sm:$0xff] %v2225
        %2242 = vst [vmem:[%s234 + $0x28] sm:$0xff] %v2226
        %2243 = vst [vmem:[%s234 + $0x30] sm:$0xff] %v2227
        %2244 = vst [vmem:[%s234 + $0x38] sm:$0xff] %v2228
        %2245 = vst [vmem:[%s234 + $0x40] sm:$0xff] %v2229
        %2246 = vst [vmem:[%s234 + $0x48] sm:$0xff] %v2230
        %2247 = vst [vmem:[%s234 + $0x50] sm:$0xff] %v2231
        %2248 = vst [vmem:[%s234 + $0x58] sm:$0xff] %v2232
        %2249 = vst [vmem:[%s234 + $0x60] sm:$0xff] %v2233
        %2250 = vst [vmem:[%s234 + $0x68] sm:$0xff] %v2234
        %2251 = vst [vmem:[%s234 + $0x70] sm:$0xff] %v2235
        %2252 = vst [vmem:[%s234 + $0x78] sm:$0xff] %v2236
        %s2253 = sand.u32 %s134, 1
        %s2254 = scalar_lea.sflag [#allocation4], %s2253
        %s2255 = sand.u32 %s134, 1
        %s2256 = smul.addr %s2255, 128
        %s2257 = scalar_lea.vmem [#allocation5], %s2256
        // Predicated region
        $region41: #{tpu_custom_call.1} parent=35 // pred_check
          %p2258 = pneg %p144
        $region42: #{tpu_custom_call.1} parent=35 // pred_check_branch
          %2260 = sbr.rel (%p2258) target = $region44
        $region43: #{tpu_custom_call.1} parent=35 // pred_region
          %s2261 = smul.u32 8, %s26
          %s2263 = ssub.s32 2048, 2048
          %2264 = vsyncadd %s2254, %s2263
          %s2265 = smul.addr %s2261, 2
          %s2266 = smul.addr %s25, 16
          %s2267 = sadd.s32 %s2265, %s2266
          %s2268 = smul.addr %s2267, 128
          %s2269 = scalar_lea.hbm %s4, %s2268
          %s2270 = sshll.u32 %s2257, 4
          %s2271 = int_to_ptr.vmem [resolvable:$true] %s2270
          %2276 = dma.vmem_to_hbm [thread:$0]  %s2271, 2048, %s2269, %s2254, 256, 256, 16
        $region44: #{tpu_custom_call.1} parent=35 // pred_fallthru
          _
      $region36: #{tpu_custom_call.1} parent=5 // pred_fallthru
        _
      %p2277 = scmp.le.s32.totalorder 2, %s16
      // Predicated region
      $region45: #{tpu_custom_call.1} parent=5 // pred_check
        %p2278 = pneg %p2277
      $region46: #{tpu_custom_call.1} parent=5 // pred_check_branch
        %2280 = sbr.rel (%p2278) target = $region48
      $region47: #{tpu_custom_call.1} parent=5 // pred_region
        %s2281 = ssub.s32 %s16, 2
        // Predicated region
        $region49: #{tpu_custom_call.1} parent=47 // pred_check
          %p2282 = pneg %p150
        $region50: #{tpu_custom_call.1} parent=47 // pred_check_branch
          %2284 = sbr.rel (%p2282) target = $region52
        $region51: #{tpu_custom_call.1} parent=47 // pred_region
          %s2285 = sand.u32 %s135, 1
          %s2286 = scalar_lea.sflag [#allocation4], %s2285
          %s2287 = sand.u32 %s135, 1
          %s2288 = smul.addr %s2287, 128
          %s2289 = scalar_lea.vmem [#allocation5], %s2288
          %2290 = dma.done %s2286, 2048
        $region52: #{tpu_custom_call.1} parent=47 // pred_fallthru
          _
      $region48: #{tpu_custom_call.1} parent=5 // pred_fallthru
        _
    $region6: #{tpu_custom_call.1} parent=1 // loop_footer
      %s20 = sadd.s32 1, %s16
    $region7: #{tpu_custom_call.1} parent=1 // loop_footer_branch
      %15 = sbr.rel target = $region3
    $region8: #{tpu_custom_call.1} parent=1 // loop_exit
      _
    %2291 = vsyncpa [#allocation3], 1
    %s2292 = scalar_lea.sflag [#allocation3], 1
    %2293 = vsyncpa %s2292, 1
    %2294 = vsyncpa [#allocation4], 1
    %s2295 = scalar_lea.sflag [#allocation4], 1
    %2296 = vsyncpa %s2295, 1

</llo_original>
